<compile_context>
chip_gen: v7x
topology: tpu7x:2x2x1
jax: 0.10.0
libtpu: 0.0.40
codegen_flags: <defaults>
</compile_context>

<pallas_src>
import functools

import jax
import jax.numpy as jnp
import numpy as np
from jax.experimental import pallas as pl
from jax.experimental.pallas import tpu as pltpu


_LANE = 128


def _layer_dims(input_dim):
    return [(input_dim, 256), (256, 64), (64, 16),
            (16, 64), (64, 256), (256, input_dim)]


def _round_up(n, m):
    return (n + m - 1) // m * m


def _tpu_vmem_capacity():
    """Per-core VMEM capacity in bytes; conservative fallback if query fails."""
    try:
        return int(pltpu.get_tpu_info().vmem_capacity_bytes)
    except Exception:
        return 64 * 1024 * 1024          # v7x per-TC VMEM (most restrictive)


# --------------------------------------------------------------------------
# Kernel: full encode->decode chain for one batch tile; weights VMEM-resident.
# --------------------------------------------------------------------------
def _autoencoder_kernel(x_ref,
                        w1_ref, b1_ref, w2_ref, b2_ref, w3_ref, b3_ref,
                        w4_ref, b4_ref, w5_ref, b5_ref, w6_ref, b6_ref,
                        o_ref):
    def linear(h_bf16, w_ref, b_ref):
        # bf16 operands on the MXU, f32 accumulation, f32 bias add on the VPU.
        return jnp.dot(h_bf16, w_ref[...],
                       preferred_element_type=jnp.float32) + b_ref[...]

    def relu_to_bf16(z_f32):
        # ReLU in f32, then narrow to bf16 for the next MXU push.
        return jnp.maximum(z_f32, 0.0).astype(jnp.bfloat16)

    # Input arrives in its original dtype (f32); narrow here instead of a
    # separate wrapper-side cast pass through HBM.
    h = x_ref[...].astype(jnp.bfloat16)               # (TB, Dp)
    h = relu_to_bf16(linear(h, w1_ref, b1_ref))       # Dp  -> 256
    h = relu_to_bf16(linear(h, w2_ref, b2_ref))       # 256 -> 128 (64 zero-padded)
    h = relu_to_bf16(linear(h, w3_ref, b3_ref))       # 128 -> 128 (16 zero-padded)
    h = relu_to_bf16(linear(h, w4_ref, b4_ref))       # 128 -> 128 (64 zero-padded)
    h = relu_to_bf16(linear(h, w5_ref, b5_ref))       # 128 -> 256
    z = linear(h, w6_ref, b6_ref)                     # 256 -> Dp, f32 logits
    # Sigmoid: exp on the EUP + approximate reciprocal (single EUP op, ~1e-4
    # error — well below the bf16 matmul error and the test tolerance).
    o_ref[...] = pl.reciprocal(1.0 + jnp.exp(-z), approx=True).astype(o_ref.dtype)


# --------------------------------------------------------------------------
# Parameter init / one-time preparation
# --------------------------------------------------------------------------
def init_params(key, input_dim):
    """Deterministic PyTorch-nn.Linear-style init.  Weights stored as (in, out)."""
    params = []
    for i, (fan_in, fan_out) in enumerate(_layer_dims(input_dim)):
        kw, kb = jax.random.split(jax.random.fold_in(key, i))
        bound = 1.0 / np.sqrt(fan_in)
        w = jax.random.uniform(kw, (fan_in, fan_out), jnp.float32, -bound, bound)
        b = jax.random.uniform(kb, (1, fan_out), jnp.float32, -bound, bound)
        params.append((w, b))
    return params


def prepare_params(params, input_dim):
    """Pad every dim to a 128-lane multiple and cast ONCE (bf16 weights, f32
    biases).  Doing this at init time removes 12 per-call pad/cast HLOs from
    the jitted forward."""
    prepared = []
    for (w, b), (fi, fo) in zip(params, _layer_dims(input_dim)):
        fi_p, fo_p = _round_up(fi, _LANE), _round_up(fo, _LANE)
        w_p = jnp.pad(w.astype(jnp.float32),
                      ((0, fi_p - fi), (0, fo_p - fo))).astype(jnp.bfloat16)
        b_p = jnp.pad(b.astype(jnp.float32).reshape(1, -1),
                      ((0, 0), (0, fo_p - fo)))
        prepared.append((w_p, b_p))
    return prepared


# --------------------------------------------------------------------------
# Tiling policy / VMEM accounting
# --------------------------------------------------------------------------
def _choose_batch_tile(batch, tb_cap):
    # tb_cap = 512 on 128-MiB-VMEM chips (v5e/v6e), 256 on v7x (64 MiB VMEM
    # and two TensorCores wanting >=2 steps each).  On v5e the MXU is 4x128x128
    # so TB=128 already fills it — tile size there is purely about DMA size /
    # per-step amortization; the memory-traffic levers matter more.
    if batch < 32:
        return max(16, _round_up(batch, 16))       # single small tile (demo path)
    if batch >= 2 * tb_cap:
        tb = tb_cap                                 # large batches: biggest tile
    elif batch >= 512:
        tb = 256
    else:
        # mid-size batches: target >=4 grid steps so v7x's two TensorCores both
        # get work and each overlaps input DMA / output writeback across steps.
        tb = _round_up(-(-batch // 4), 16)
    return min(tb, tb_cap)


def _vmem_estimate(tb, d_pad, padded_dims, in_itemsize, out_itemsize, weight_bufs):
    io = 2 * tb * d_pad * in_itemsize + 2 * tb * d_pad * out_itemsize   # dbl-buffered in/out
    wb = weight_bufs * sum(fi * fo * 2 + fo * 4 for fi, fo in padded_dims)
    # Activations: only two consecutive layers are live at once (bf16 in + f32 out);
    # bound both by f32 width of the widest consecutive pair.
    act = tb * max(fi + fo for fi, fo in padded_dims) * 4
    return io + wb + act


# --------------------------------------------------------------------------
# Forward
# --------------------------------------------------------------------------
@functools.partial(jax.jit, static_argnames=("out_dtype",))
def autoencoder_forward(x, prepared_params, out_dtype=jnp.float32):
    """Forward pass.  `prepared_params` must come from prepare_params().
    out_dtype=jnp.bfloat16 is the fast path (halves output HBM traffic)."""
    B = x.shape[0]
    D = int(np.prod(x.shape[1:]))
    D_pad = _round_up(D, _LANE)

    padded_dims = [(w.shape[0], w.shape[1]) for w, _ in prepared_params]
    assert padded_dims[0][0] == D_pad and padded_dims[-1][1] == D_pad, (
        "prepared_params do not match this input_dim")

    # --- chip-aware VMEM budget ---------------------------------------------
    capacity = _tpu_vmem_capacity()
    budget = capacity * 3 // 4                 # ~96 MiB v5e/v6e, ~48 MiB v7x
    tb_cap = 256 if capacity <= 64 * 1024 * 1024 else 512

    in_itemsize = jnp.dtype(x.dtype).itemsize
    out_itemsize = jnp.dtype(out_dtype).itemsize

    # Single-buffer the resident weights only when their double-buffered copy
    # would eat a meaningful slice of the budget (large input_dim, esp. v7x).
    w_bytes = sum(fi * fo * 2 + fo * 4 for fi, fo in padded_dims)
    single_buffer_weights = (2 * w_bytes) > (budget // 8)
    weight_bufs = 1 if single_buffer_weights else 2

    # --- batch tiling ---------------------------------------------------------
    TB = _choose_batch_tile(B, tb_cap)
    while (_vmem_estimate(TB, D_pad, padded_dims, in_itemsize, out_itemsize,
                          weight_bufs) > budget and TB > 16):
        TB = max(16, (TB // 2) // 16 * 16)
    if _vmem_estimate(TB, D_pad, padded_dims, in_itemsize, out_itemsize,
                      weight_bufs) > budget:
        # TODO(synk): K-tile the D->256 first layer (and N-tile the 256->D last
        # layer) over a second 'arbitrary' grid axis with an f32 VMEM accumulator
        # for very large input_dim whose weights alone exceed the VMEM budget.
        raise NotImplementedError(
            f"input_dim={D}: first/last layer weights exceed the VMEM budget")
    B_pad = _round_up(B, TB)

    # --- operand prep: flatten (nn.Flatten); pad only if actually needed ------
    xf = x.reshape(B, D)
    if B_pad != B or D_pad != D:
        xf = jnp.pad(xf, ((0, B_pad - B), (0, D_pad - D)))

    flat_params = [t for pair in prepared_params for t in pair]

    # --- specs ----------------------------------------------------------------
    x_spec = pl.BlockSpec((TB, D_pad), lambda i: (i, 0))
    out_spec = pl.BlockSpec((TB, D_pad), lambda i: (i, 0))
    # Weights/biases: constant block index -> resident, never re-fetched.
    if single_buffer_weights:
        param_specs = [pl.BlockSpec(p.shape, lambda i: (0, 0),
                                    pipeline_mode=pl.Buffered(1))
                       for p in flat_params]
    else:
        param_specs = [pl.BlockSpec(p.shape, lambda i: (0, 0))
                       for p in flat_params]

    flops = 2 * B_pad * sum(fi * fo for fi, fo in padded_dims)
    transcendentals = B_pad * D_pad                      # exp in the sigmoid
    bytes_accessed = (B_pad * D_pad * (in_itemsize + out_itemsize) + w_bytes)

    est = _vmem_estimate(TB, D_pad, padded_dims, in_itemsize, out_itemsize,
                         weight_bufs)
    vmem_limit = int(min(budget, max(32 * 1024 * 1024, 2 * est)))

    out = pl.pallas_call(
        _autoencoder_kernel,
        out_shape=jax.ShapeDtypeStruct((B_pad, D_pad), out_dtype),
        grid_spec=pltpu.PrefetchScalarGridSpec(
            num_scalar_prefetch=0,
            grid=(B_pad // TB,),
            in_specs=[x_spec] + param_specs,
            out_specs=out_spec,
        ),
        compiler_params=pltpu.CompilerParams(
            dimension_semantics=("parallel",),     # batch axis shards across TCs
            vmem_limit_bytes=vmem_limit),
        cost_estimate=pl.CostEstimate(
            flops=flops,
            transcendentals=transcendentals,
            bytes_accessed=bytes_accessed),
    )(xf, *flat_params)

    return out[:B, :D].reshape(x.shape)


# --------------------------------------------------------------------------
# References
# --------------------------------------------------------------------------
def _reference_bf16(x, params):
    """Pure-JAX reference with the same precision policy as the kernel."""
    B = x.shape[0]
    h = x.reshape(B, -1).astype(jnp.bfloat16)
    for i, (w, b) in enumerate(params):
        z = jnp.dot(h, w.astype(jnp.bfloat16),
                    preferred_element_type=jnp.float32) + b
        if i < len(params) - 1:
            h = jnp.maximum(z, 0.0).astype(jnp.bfloat16)
        else:
            h = 1.0 / (1.0 + jnp.exp(-z))
    return h.reshape(x.shape)


def _reference_f32(x, params):
    """PyTorch-equivalent full-f32 math (loose fidelity check for the bf16 matmuls)."""
    B = x.shape[0]
    h = x.reshape(B, -1).astype(jnp.float32)
    for i, (w, b) in enumerate(params):
        h = h @ w + b
        h = jnp.maximum(h, 0.0) if i < len(params) - 1 else jax.nn.sigmoid(h)
    return h.reshape(x.shape)


if __name__ == "__main__":
    key = jax.random.PRNGKey(0)
    kx, kp = jax.random.split(key)

    # NCHW input like PyTorch: batch=8, channels=4, spatial 16x16 -> input_dim=1024.
    x = jax.random.normal(kx, (8, 4, 16, 16), jnp.float32)
    input_dim = 4 * 16 * 16
    params = init_params(kp, input_dim)
    prepared = prepare_params(params, input_dim)     # one-time pad + cast

    # Default (PyTorch-matching) f32 output path.
    y = jax.block_until_ready(autoencoder_forward(x, prepared))
    assert y.shape == x.shape and y.dtype == jnp.float32

    # Precision-matched reference (bf16 matmul operands, f32 accumulation).
    y_ref = jax.block_until_ready(_reference_bf16(x, params))
    np.testing.assert_allclose(np.asarray(y), np.asarray(y_ref), rtol=2e-3, atol=2e-3)

    # Loose check against the pure-f32 PyTorch math (bf16 fidelity sanity check).
    y_f32 = jax.block_until_ready(_reference_f32(x, params))
    np.testing.assert_allclose(np.asarray(y), np.asarray(y_f32), rtol=0.0, atol=5e-2)

    # Fast path: bf16 output halves the kernel's HBM write traffic.
    y_bf16 = jax.block_until_ready(
        autoencoder_forward(x, prepared, out_dtype=jnp.bfloat16))
    assert y_bf16.shape == x.shape and y_bf16.dtype == jnp.bfloat16
    np.testing.assert_allclose(np.asarray(y_bf16, dtype=np.float32),
                               np.asarray(y_ref), rtol=0.0, atol=1e-2)

    print("KERNEL_OK")
</pallas_src>

<mosaic_0001>
module attributes {stable_mosaic.version = 11 : i64} {
  func.func @_autoencoder_kernel(%arg0: i32, %arg1: memref<16x1024xf32, #tpu.memory_space<vmem>>, %arg2: memref<1024x256xbf16, #tpu.memory_space<vmem>>, %arg3: memref<1x256xf32, #tpu.memory_space<vmem>>, %arg4: memref<256x128xbf16, #tpu.memory_space<vmem>>, %arg5: memref<1x128xf32, #tpu.memory_space<vmem>>, %arg6: memref<128x128xbf16, #tpu.memory_space<vmem>>, %arg7: memref<1x128xf32, #tpu.memory_space<vmem>>, %arg8: memref<128x128xbf16, #tpu.memory_space<vmem>>, %arg9: memref<1x128xf32, #tpu.memory_space<vmem>>, %arg10: memref<128x256xbf16, #tpu.memory_space<vmem>>, %arg11: memref<1x256xf32, #tpu.memory_space<vmem>>, %arg12: memref<256x1024xbf16, #tpu.memory_space<vmem>>, %arg13: memref<1x1024xf32, #tpu.memory_space<vmem>>, %arg14: memref<16x1024xf32, #tpu.memory_space<vmem>>) attributes {dimension_semantics = [#tpu.dimension_semantics<parallel>], iteration_bounds = array<i64: 1>, scalar_prefetch = 0 : i64, scratch_operands = 0 : i64, tpu.core_type = #tpu.core_type<tc>, window_params = [{transform_indices = @transform_0, window_bounds = array<i64: 16, 1024>}, {pipeline_mode = #tpu.pipeline_mode<synchronous>, transform_indices = @transform_1, window_bounds = array<i64: 1024, 256>}, {pipeline_mode = #tpu.pipeline_mode<synchronous>, transform_indices = @transform_2, window_bounds = array<i64: 1, 256>}, {pipeline_mode = #tpu.pipeline_mode<synchronous>, transform_indices = @transform_3, window_bounds = array<i64: 256, 128>}, {pipeline_mode = #tpu.pipeline_mode<synchronous>, transform_indices = @transform_4, window_bounds = array<i64: 1, 128>}, {pipeline_mode = #tpu.pipeline_mode<synchronous>, transform_indices = @transform_5, window_bounds = array<i64: 128, 128>}, {pipeline_mode = #tpu.pipeline_mode<synchronous>, transform_indices = @transform_6, window_bounds = array<i64: 1, 128>}, {pipeline_mode = #tpu.pipeline_mode<synchronous>, transform_indices = @transform_7, window_bounds = array<i64: 128, 128>}, {pipeline_mode = #tpu.pipeline_mode<synchronous>, transform_indices = @transform_8, window_bounds = array<i64: 1, 128>}, {pipeline_mode = #tpu.pipeline_mode<synchronous>, transform_indices = @transform_9, window_bounds = array<i64: 128, 256>}, {pipeline_mode = #tpu.pipeline_mode<synchronous>, transform_indices = @transform_10, window_bounds = array<i64: 1, 256>}, {pipeline_mode = #tpu.pipeline_mode<synchronous>, transform_indices = @transform_11, window_bounds = array<i64: 256, 1024>}, {pipeline_mode = #tpu.pipeline_mode<synchronous>, transform_indices = @transform_12, window_bounds = array<i64: 1, 1024>}, {transform_indices = @transform_13, window_bounds = array<i64: 16, 1024>}]} {
    %c0 = arith.constant 0 : index
    %c0_0 = arith.constant 0 : index
    %0 = vector.load %arg1[%c0, %c0_0] : memref<16x1024xf32, #tpu.memory_space<vmem>>, vector<16x1024xf32>
    %1 = arith.truncf %0 : vector<16x1024xf32> to vector<16x1024xbf16>
    %c0_1 = arith.constant 0 : index
    %c0_2 = arith.constant 0 : index
    %2 = vector.load %arg2[%c0_1, %c0_2] : memref<1024x256xbf16, #tpu.memory_space<vmem>>, vector<1024x256xbf16>
    %cst = arith.constant dense<0.000000e+00> : vector<16x256xf32>
    %3 = tpu.matmul %1, %2, %cst {dimension_numbers = #tpu.dot_dimension_numbers<[1], [0], [0], [1], [0, 0, 1, 1], [], []>} : vector<16x1024xbf16>, vector<1024x256xbf16>, vector<16x256xf32> -> vector<16x256xf32>
    %c0_3 = arith.constant 0 : index
    %c0_4 = arith.constant 0 : index
    %4 = vector.load %arg3[%c0_3, %c0_4] : memref<1x256xf32, #tpu.memory_space<vmem>>, vector<1x256xf32>
    %5 = vector.broadcast %4 : vector<1x256xf32> to vector<16x256xf32>
    %6 = arith.addf %3, %5 : vector<16x256xf32>
    %cst_5 = arith.constant 0.000000e+00 : f32
    %7 = vector.broadcast %cst_5 : f32 to vector<16x256xf32>
    %8 = arith.maximumf %6, %7 : vector<16x256xf32>
    %9 = arith.truncf %8 : vector<16x256xf32> to vector<16x256xbf16>
    %c0_6 = arith.constant 0 : index
    %c0_7 = arith.constant 0 : index
    %10 = vector.load %arg4[%c0_6, %c0_7] : memref<256x128xbf16, #tpu.memory_space<vmem>>, vector<256x128xbf16>
    %cst_8 = arith.constant dense<0.000000e+00> : vector<16x128xf32>
    %11 = tpu.matmul %9, %10, %cst_8 {dimension_numbers = #tpu.dot_dimension_numbers<[1], [0], [0], [1], [0, 0, 1, 1], [], []>} : vector<16x256xbf16>, vector<256x128xbf16>, vector<16x128xf32> -> vector<16x128xf32>
    %c0_9 = arith.constant 0 : index
    %c0_10 = arith.constant 0 : index
    %12 = vector.load %arg5[%c0_9, %c0_10] : memref<1x128xf32, #tpu.memory_space<vmem>>, vector<1x128xf32>
    %13 = vector.broadcast %12 : vector<1x128xf32> to vector<16x128xf32>
    %14 = arith.addf %11, %13 : vector<16x128xf32>
    %cst_11 = arith.constant 0.000000e+00 : f32
    %15 = vector.broadcast %cst_11 : f32 to vector<16x128xf32>
    %16 = arith.maximumf %14, %15 : vector<16x128xf32>
    %17 = arith.truncf %16 : vector<16x128xf32> to vector<16x128xbf16>
    %c0_12 = arith.constant 0 : index
    %c0_13 = arith.constant 0 : index
    %18 = vector.load %arg6[%c0_12, %c0_13] : memref<128x128xbf16, #tpu.memory_space<vmem>>, vector<128x128xbf16>
    %cst_14 = arith.constant dense<0.000000e+00> : vector<16x128xf32>
    %19 = tpu.matmul %17, %18, %cst_14 {dimension_numbers = #tpu.dot_dimension_numbers<[1], [0], [0], [1], [0, 0, 1, 1], [], []>} : vector<16x128xbf16>, vector<128x128xbf16>, vector<16x128xf32> -> vector<16x128xf32>
    %c0_15 = arith.constant 0 : index
    %c0_16 = arith.constant 0 : index
    %20 = vector.load %arg7[%c0_15, %c0_16] : memref<1x128xf32, #tpu.memory_space<vmem>>, vector<1x128xf32>
    %21 = vector.broadcast %20 : vector<1x128xf32> to vector<16x128xf32>
    %22 = arith.addf %19, %21 : vector<16x128xf32>
    %cst_17 = arith.constant 0.000000e+00 : f32
    %23 = vector.broadcast %cst_17 : f32 to vector<16x128xf32>
    %24 = arith.maximumf %22, %23 : vector<16x128xf32>
    %25 = arith.truncf %24 : vector<16x128xf32> to vector<16x128xbf16>
    %c0_18 = arith.constant 0 : index
    %c0_19 = arith.constant 0 : index
    %26 = vector.load %arg8[%c0_18, %c0_19] : memref<128x128xbf16, #tpu.memory_space<vmem>>, vector<128x128xbf16>
    %cst_20 = arith.constant dense<0.000000e+00> : vector<16x128xf32>
    %27 = tpu.matmul %25, %26, %cst_20 {dimension_numbers = #tpu.dot_dimension_numbers<[1], [0], [0], [1], [0, 0, 1, 1], [], []>} : vector<16x128xbf16>, vector<128x128xbf16>, vector<16x128xf32> -> vector<16x128xf32>
    %c0_21 = arith.constant 0 : index
    %c0_22 = arith.constant 0 : index
    %28 = vector.load %arg9[%c0_21, %c0_22] : memref<1x128xf32, #tpu.memory_space<vmem>>, vector<1x128xf32>
    %29 = vector.broadcast %28 : vector<1x128xf32> to vector<16x128xf32>
    %30 = arith.addf %27, %29 : vector<16x128xf32>
    %cst_23 = arith.constant 0.000000e+00 : f32
    %31 = vector.broadcast %cst_23 : f32 to vector<16x128xf32>
    %32 = arith.maximumf %30, %31 : vector<16x128xf32>
    %33 = arith.truncf %32 : vector<16x128xf32> to vector<16x128xbf16>
    %c0_24 = arith.constant 0 : index
    %c0_25 = arith.constant 0 : index
    %34 = vector.load %arg10[%c0_24, %c0_25] : memref<128x256xbf16, #tpu.memory_space<vmem>>, vector<128x256xbf16>
    %cst_26 = arith.constant dense<0.000000e+00> : vector<16x256xf32>
    %35 = tpu.matmul %33, %34, %cst_26 {dimension_numbers = #tpu.dot_dimension_numbers<[1], [0], [0], [1], [0, 0, 1, 1], [], []>} : vector<16x128xbf16>, vector<128x256xbf16>, vector<16x256xf32> -> vector<16x256xf32>
    %c0_27 = arith.constant 0 : index
    %c0_28 = arith.constant 0 : index
    %36 = vector.load %arg11[%c0_27, %c0_28] : memref<1x256xf32, #tpu.memory_space<vmem>>, vector<1x256xf32>
    %37 = vector.broadcast %36 : vector<1x256xf32> to vector<16x256xf32>
    %38 = arith.addf %35, %37 : vector<16x256xf32>
    %cst_29 = arith.constant 0.000000e+00 : f32
    %39 = vector.broadcast %cst_29 : f32 to vector<16x256xf32>
    %40 = arith.maximumf %38, %39 : vector<16x256xf32>
    %41 = arith.truncf %40 : vector<16x256xf32> to vector<16x256xbf16>
    %c0_30 = arith.constant 0 : index
    %c0_31 = arith.constant 0 : index
    %42 = vector.load %arg12[%c0_30, %c0_31] : memref<256x1024xbf16, #tpu.memory_space<vmem>>, vector<256x1024xbf16>
    %cst_32 = arith.constant dense<0.000000e+00> : vector<16x1024xf32>
    %43 = tpu.matmul %41, %42, %cst_32 {dimension_numbers = #tpu.dot_dimension_numbers<[1], [0], [0], [1], [0, 0, 1, 1], [], []>} : vector<16x256xbf16>, vector<256x1024xbf16>, vector<16x1024xf32> -> vector<16x1024xf32>
    %c0_33 = arith.constant 0 : index
    %c0_34 = arith.constant 0 : index
    %44 = vector.load %arg13[%c0_33, %c0_34] : memref<1x1024xf32, #tpu.memory_space<vmem>>, vector<1x1024xf32>
    %45 = vector.broadcast %44 : vector<1x1024xf32> to vector<16x1024xf32>
    %46 = arith.addf %43, %45 : vector<16x1024xf32>
    %cst_35 = arith.constant 0.000000e+00 : f32
    %47 = vector.broadcast %cst_35 : f32 to vector<16x1024xf32>
    %48 = arith.subf %47, %46 : vector<16x1024xf32>
    %49 = math.exp %48 : vector<16x1024xf32>
    %cst_36 = arith.constant 1.000000e+00 : f32
    %50 = vector.broadcast %cst_36 : f32 to vector<16x1024xf32>
    %51 = arith.addf %50, %49 : vector<16x1024xf32>
    %52 = tpu.reciprocal %51 {approx = true} : vector<16x1024xf32> -> vector<16x1024xf32>
    %c0_37 = arith.constant 0 : index
    %c0_38 = arith.constant 0 : index
    %53 = vector.load %arg14[%c0_37, %c0_38] : memref<16x1024xf32, #tpu.memory_space<vmem>>, vector<16x1024xf32>
    tpu.vector_store %arg14[%c0_37, %c0_38], %52 {strides = array<i32>} : memref<16x1024xf32, #tpu.memory_space<vmem>>, vector<16x1024xf32>,
    return
  }
  func.func @transform_0(%arg0: i32) -> (i32, i32) {
    %c0_i32 = arith.constant 0 : i32
    %c0_i32_0 = arith.constant 0 : i32
    return %arg0, %c0_i32 : i32, i32
  }
  func.func @transform_1(%arg0: i32) -> (i32, i32) {
    %c0_i32 = arith.constant 0 : i32
    %c0_i32_0 = arith.constant 0 : i32
    %c0_i32_1 = arith.constant 0 : i32
    return %c0_i32, %c0_i32_0 : i32, i32
  }
  func.func @transform_2(%arg0: i32) -> (i32, i32) {
    %c0_i32 = arith.constant 0 : i32
    %c0_i32_0 = arith.constant 0 : i32
    %c0_i32_1 = arith.constant 0 : i32
    return %c0_i32, %c0_i32_0 : i32, i32
  }
  func.func @transform_3(%arg0: i32) -> (i32, i32) {
    %c0_i32 = arith.constant 0 : i32
    %c0_i32_0 = arith.constant 0 : i32
    %c0_i32_1 = arith.constant 0 : i32
    return %c0_i32, %c0_i32_0 : i32, i32
  }
  func.func @transform_4(%arg0: i32) -> (i32, i32) {
    %c0_i32 = arith.constant 0 : i32
    %c0_i32_0 = arith.constant 0 : i32
    %c0_i32_1 = arith.constant 0 : i32
    return %c0_i32, %c0_i32_0 : i32, i32
  }
  func.func @transform_5(%arg0: i32) -> (i32, i32) {
    %c0_i32 = arith.constant 0 : i32
    %c0_i32_0 = arith.constant 0 : i32
    %c0_i32_1 = arith.constant 0 : i32
    return %c0_i32, %c0_i32_0 : i32, i32
  }
  func.func @transform_6(%arg0: i32) -> (i32, i32) {
    %c0_i32 = arith.constant 0 : i32
    %c0_i32_0 = arith.constant 0 : i32
    %c0_i32_1 = arith.constant 0 : i32
    return %c0_i32, %c0_i32_0 : i32, i32
  }
  func.func @transform_7(%arg0: i32) -> (i32, i32) {
    %c0_i32 = arith.constant 0 : i32
    %c0_i32_0 = arith.constant 0 : i32
    %c0_i32_1 = arith.constant 0 : i32
    return %c0_i32, %c0_i32_0 : i32, i32
  }
  func.func @transform_8(%arg0: i32) -> (i32, i32) {
    %c0_i32 = arith.constant 0 : i32
    %c0_i32_0 = arith.constant 0 : i32
    %c0_i32_1 = arith.constant 0 : i32
    return %c0_i32, %c0_i32_0 : i32, i32
  }
  func.func @transform_9(%arg0: i32) -> (i32, i32) {
    %c0_i32 = arith.constant 0 : i32
    %c0_i32_0 = arith.constant 0 : i32
    %c0_i32_1 = arith.constant 0 : i32
    return %c0_i32, %c0_i32_0 : i32, i32
  }
  func.func @transform_10(%arg0: i32) -> (i32, i32) {
    %c0_i32 = arith.constant 0 : i32
    %c0_i32_0 = arith.constant 0 : i32
    %c0_i32_1 = arith.constant 0 : i32
    return %c0_i32, %c0_i32_0 : i32, i32
  }
  func.func @transform_11(%arg0: i32) -> (i32, i32) {
    %c0_i32 = arith.constant 0 : i32
    %c0_i32_0 = arith.constant 0 : i32
    %c0_i32_1 = arith.constant 0 : i32
    return %c0_i32, %c0_i32_0 : i32, i32
  }
  func.func @transform_12(%arg0: i32) -> (i32, i32) {
    %c0_i32 = arith.constant 0 : i32
    %c0_i32_0 = arith.constant 0 : i32
    %c0_i32_1 = arith.constant 0 : i32
    return %c0_i32, %c0_i32_0 : i32, i32
  }
  func.func @transform_13(%arg0: i32) -> (i32, i32) {
    %c0_i32 = arith.constant 0 : i32
    %c0_i32_0 = arith.constant 0 : i32
    return %arg0, %c0_i32 : i32, i32
  }
}

</mosaic_0001>

<llo_original>
// kernel: autoencoder_forward.1
$region0: #{autoencoder_forward.1}
  #allocation0 [shape = 'u32[]', space=smem, size = 0x4, offset = 0x4, fixed_abs, tag = 'smem constant byte address 0x4 - core index']
  #allocation1 [shape = 'u32[144,128]{1,0:T(1,128)}', space=vmem, size = 0x12000, scoped, tag = 'internal scratch']
  %s0 = inlined_call_operand.vmem [shape: f32[16,1024], index: 0, kind: input, shape index: {}]
  %s1 = inlined_call_operand.hbm [shape: bf16[1024,256], index: 1, kind: input, shape index: {}]
  %s2 = inlined_call_operand.vmem [shape: f32[1,256], index: 2, kind: input, shape index: {}]
  %s3 = inlined_call_operand.vmem [shape: bf16[256,128], index: 3, kind: input, shape index: {}]
  %s4 = inlined_call_operand.vmem [shape: f32[1,128], index: 4, kind: input, shape index: {}]
  %s5 = inlined_call_operand.vmem [shape: bf16[128,128], index: 5, kind: input, shape index: {}]
  %s6 = inlined_call_operand.vmem [shape: f32[1,128], index: 6, kind: input, shape index: {}]
  %s7 = inlined_call_operand.vmem [shape: bf16[128,128], index: 7, kind: input, shape index: {}]
  %s8 = inlined_call_operand.vmem [shape: f32[1,128], index: 8, kind: input, shape index: {}]
  %s9 = inlined_call_operand.vmem [shape: bf16[128,256], index: 9, kind: input, shape index: {}]
  %s10 = inlined_call_operand.vmem [shape: f32[1,256], index: 10, kind: input, shape index: {}]
  %s11 = inlined_call_operand.hbm [shape: bf16[256,1024], index: 11, kind: input, shape index: {}]
  %s12 = inlined_call_operand.vmem [shape: f32[1,1024], index: 12, kind: input, shape index: {}]
  %s13 = inlined_call_operand.vmem [shape: f32[16,1024], index: 13, kind: output, shape index: {}]
  %s14 = sld [smem:[#allocation0]]
  $region70: #{autoencoder_forward.1} parent=0
    _
  %s16 = ssub.s32 1, %s14
  %s17 = scalar_select 0, %s16, %s14
  $region1: #{autoencoder_forward.1} parent=0
    #allocation2 [shape = 'u8[524288]{0}', space=vmem, size = 0x80000, scoped, tag = 'input window, operand 1, single buffered']
    #allocation3 [shape = 's32[1]{0}', space=sflag, size = 0x4, scoped, tag = 'scoped memory for autoencoder_forward.1']
    #allocation4 [shape = 'u8[524288]{0}', space=vmem, size = 0x80000, scoped, tag = 'input window, operand 11, single buffered']
    #allocation5 [shape = 's32[1]{0}', space=sflag, size = 0x4, scoped, tag = 'scoped memory for autoencoder_forward.1']
    %18 = vsyncpa [#allocation3], 0
    %19 = vsyncpa [#allocation5], 0
    // Predicated region
    $region2: #{autoencoder_forward.1} parent=1 // pred_check
      _
    $region3: #{autoencoder_forward.1} parent=1 // pred_check_branch
      %21 = sbr.rel (0) target = $region5
    $region4: #{autoencoder_forward.1} parent=1 // pred_region
      _
    $region5: #{autoencoder_forward.1} parent=1 // pred_fallthru
      _
    // Predicated region
    $region6: #{autoencoder_forward.1} parent=1 // pred_check
      _
    $region7: #{autoencoder_forward.1} parent=1 // pred_check_branch
      %23 = sbr.rel (0) target = $region9
    $region8: #{autoencoder_forward.1} parent=1 // pred_region
      %s25 = ssub.s32 16384, 16384
      %26 = vsyncadd [#allocation3], %s25
      %s27 = sshll.u32 [#allocation2], 4
      %s28 = int_to_ptr.vmem [resolvable:$true] %s27
      %33 = dma.hbm_to_vmem [thread:$0]  %s1, 16384, %s28, [#allocation3], 128, 128, 8
    $region9: #{autoencoder_forward.1} parent=1 // pred_fallthru
      _
    // Predicated region
    $region10: #{autoencoder_forward.1} parent=1 // pred_check
      _
    $region11: #{autoencoder_forward.1} parent=1 // pred_check_branch
      %35 = sbr.rel (0) target = $region13
    $region12: #{autoencoder_forward.1} parent=1 // pred_region
      _
    $region13: #{autoencoder_forward.1} parent=1 // pred_fallthru
      _
    // Predicated region
    $region14: #{autoencoder_forward.1} parent=1 // pred_check
      _
    $region15: #{autoencoder_forward.1} parent=1 // pred_check_branch
      %37 = sbr.rel (0) target = $region17
    $region16: #{autoencoder_forward.1} parent=1 // pred_region
      _
    $region17: #{autoencoder_forward.1} parent=1 // pred_fallthru
      _
    // Predicated region
    $region18: #{autoencoder_forward.1} parent=1 // pred_check
      _
    $region19: #{autoencoder_forward.1} parent=1 // pred_check_branch
      %39 = sbr.rel (0) target = $region21
    $region20: #{autoencoder_forward.1} parent=1 // pred_region
      _
    $region21: #{autoencoder_forward.1} parent=1 // pred_fallthru
      _
    // Predicated region
    $region22: #{autoencoder_forward.1} parent=1 // pred_check
      _
    $region23: #{autoencoder_forward.1} parent=1 // pred_check_branch
      %41 = sbr.rel (0) target = $region25
    $region24: #{autoencoder_forward.1} parent=1 // pred_region
      _
    $region25: #{autoencoder_forward.1} parent=1 // pred_fallthru
      _
    // Predicated region
    $region26: #{autoencoder_forward.1} parent=1 // pred_check
      _
    $region27: #{autoencoder_forward.1} parent=1 // pred_check_branch
      %43 = sbr.rel (0) target = $region29
    $region28: #{autoencoder_forward.1} parent=1 // pred_region
      _
    $region29: #{autoencoder_forward.1} parent=1 // pred_fallthru
      _
    // Predicated region
    $region30: #{autoencoder_forward.1} parent=1 // pred_check
      _
    $region31: #{autoencoder_forward.1} parent=1 // pred_check_branch
      %45 = sbr.rel (0) target = $region33
    $region32: #{autoencoder_forward.1} parent=1 // pred_region
      _
    $region33: #{autoencoder_forward.1} parent=1 // pred_fallthru
      _
    // Predicated region
    $region34: #{autoencoder_forward.1} parent=1 // pred_check
      _
    $region35: #{autoencoder_forward.1} parent=1 // pred_check_branch
      %47 = sbr.rel (0) target = $region37
    $region36: #{autoencoder_forward.1} parent=1 // pred_region
      _
    $region37: #{autoencoder_forward.1} parent=1 // pred_fallthru
      _
    // Predicated region
    $region38: #{autoencoder_forward.1} parent=1 // pred_check
      _
    $region39: #{autoencoder_forward.1} parent=1 // pred_check_branch
      %49 = sbr.rel (0) target = $region41
    $region40: #{autoencoder_forward.1} parent=1 // pred_region
      _
    $region41: #{autoencoder_forward.1} parent=1 // pred_fallthru
      _
    // Predicated region
    $region42: #{autoencoder_forward.1} parent=1 // pred_check
      _
    $region43: #{autoencoder_forward.1} parent=1 // pred_check_branch
      %51 = sbr.rel (0) target = $region45
    $region44: #{autoencoder_forward.1} parent=1 // pred_region
      _
    $region45: #{autoencoder_forward.1} parent=1 // pred_fallthru
      _
    // Predicated region
    $region46: #{autoencoder_forward.1} parent=1 // pred_check
      _
    $region47: #{autoencoder_forward.1} parent=1 // pred_check_branch
      %53 = sbr.rel (0) target = $region49
    $region48: #{autoencoder_forward.1} parent=1 // pred_region
      %s55 = ssub.s32 16384, 16384
      %56 = vsyncadd [#allocation5], %s55
      %s57 = sshll.u32 [#allocation4], 4
      %s58 = int_to_ptr.vmem [resolvable:$true] %s57
      %63 = dma.hbm_to_vmem [thread:$0]  %s11, 16384, %s58, [#allocation5], 512, 512, 32
    $region49: #{autoencoder_forward.1} parent=1 // pred_fallthru
      _
    // Predicated region
    $region50: #{autoencoder_forward.1} parent=1 // pred_check
      _
    $region51: #{autoencoder_forward.1} parent=1 // pred_check_branch
      %65 = sbr.rel (0) target = $region53
    $region52: #{autoencoder_forward.1} parent=1 // pred_region
      _
    $region53: #{autoencoder_forward.1} parent=1 // pred_fallthru
      _
    // Predicated region
    $region54: #{autoencoder_forward.1} parent=1 // pred_check
      _
    $region55: #{autoencoder_forward.1} parent=1 // pred_check_branch
      %67 = sbr.rel (0) target = $region57
    $region56: #{autoencoder_forward.1} parent=1 // pred_region
      %68 = dma.done [#allocation3], 16384
    $region57: #{autoencoder_forward.1} parent=1 // pred_fallthru
      _
    // Predicated region
    $region58: #{autoencoder_forward.1} parent=1 // pred_check
      _
    $region59: #{autoencoder_forward.1} parent=1 // pred_check_branch
      %70 = sbr.rel (0) target = $region61
    $region60: #{autoencoder_forward.1} parent=1 // pred_region
      %71 = dma.done [#allocation5], 16384
    $region61: #{autoencoder_forward.1} parent=1 // pred_fallthru
      _
    %v73 = vld [vmem:[%s0] sm:$0xff]
    %v74 = vld [vmem:[%s0 + $0x8] sm:$0xff]
    %v75 = vld [vmem:[%s0 + $0x10] sm:$0xff]
    %v76 = vld [vmem:[%s0 + $0x18] sm:$0xff]
    %v77 = vld [vmem:[%s0 + $0x20] sm:$0xff]
    %v78 = vld [vmem:[%s0 + $0x28] sm:$0xff]
    %v79 = vld [vmem:[%s0 + $0x30] sm:$0xff]
    %v80 = vld [vmem:[%s0 + $0x38] sm:$0xff]
    %v81 = vld [vmem:[%s0 + $0x40] sm:$0xff]
    %v82 = vld [vmem:[%s0 + $0x48] sm:$0xff]
    %v83 = vld [vmem:[%s0 + $0x50] sm:$0xff]
    %v84 = vld [vmem:[%s0 + $0x58] sm:$0xff]
    %v85 = vld [vmem:[%s0 + $0x60] sm:$0xff]
    %v86 = vld [vmem:[%s0 + $0x68] sm:$0xff]
    %v87 = vld [vmem:[%s0 + $0x70] sm:$0xff]
    %v88 = vld [vmem:[%s0 + $0x78] sm:$0xff]
    %v89 = vpack.c.bf16 %v81, %v73
    %v90 = vpack.c.bf16 %v82, %v74
    %v91 = vpack.c.bf16 %v83, %v75
    %v92 = vpack.c.bf16 %v84, %v76
    %v93 = vpack.c.bf16 %v85, %v77
    %v94 = vpack.c.bf16 %v86, %v78
    %v95 = vpack.c.bf16 %v87, %v79
    %v96 = vpack.c.bf16 %v88, %v80
    %v97 = vld [vmem:[#allocation2] sm:$0xff]
    %v98 = vld [vmem:[#allocation2 + $0x8] sm:$0xff]
    %v99 = vld [vmem:[#allocation2 + $0x10] sm:$0xff]
    %v100 = vld [vmem:[#allocation2 + $0x18] sm:$0xff]
    %v101 = vld [vmem:[#allocation2 + $0x20] sm:$0xff]
    %v102 = vld [vmem:[#allocation2 + $0x28] sm:$0xff]
    %v103 = vld [vmem:[#allocation2 + $0x30] sm:$0xff]
    %v104 = vld [vmem:[#allocation2 + $0x38] sm:$0xff]
    %v105 = vld [vmem:[#allocation2 + $0x40] sm:$0xff]
    %v106 = vld [vmem:[#allocation2 + $0x48] sm:$0xff]
    %v107 = vld [vmem:[#allocation2 + $0x50] sm:$0xff]
    %v108 = vld [vmem:[#allocation2 + $0x58] sm:$0xff]
    %v109 = vld [vmem:[#allocation2 + $0x60] sm:$0xff]
    %v110 = vld [vmem:[#allocation2 + $0x68] sm:$0xff]
    %v111 = vld [vmem:[#allocation2 + $0x70] sm:$0xff]
    %v112 = vld [vmem:[#allocation2 + $0x78] sm:$0xff]
    %v113 = vld [vmem:[#allocation2 + $0x80] sm:$0xff]
    %v114 = vld [vmem:[#allocation2 + $0x88] sm:$0xff]
    %v115 = vld [vmem:[#allocation2 + $0x90] sm:$0xff]
    %v116 = vld [vmem:[#allocation2 + $0x98] sm:$0xff]
    %v117 = vld [vmem:[#allocation2 + $0xa0] sm:$0xff]
    %v118 = vld [vmem:[#allocation2 + $0xa8] sm:$0xff]
    %v119 = vld [vmem:[#allocation2 + $0xb0] sm:$0xff]
    %v120 = vld [vmem:[#allocation2 + $0xb8] sm:$0xff]
    %v121 = vld [vmem:[#allocation2 + $0xc0] sm:$0xff]
    %v122 = vld [vmem:[#allocation2 + $0xc8] sm:$0xff]
    %v123 = vld [vmem:[#allocation2 + $0xd0] sm:$0xff]
    %v124 = vld [vmem:[#allocation2 + $0xd8] sm:$0xff]
    %v125 = vld [vmem:[#allocation2 + $0xe0] sm:$0xff]
    %v126 = vld [vmem:[#allocation2 + $0xe8] sm:$0xff]
    %v127 = vld [vmem:[#allocation2 + $0xf0] sm:$0xff]
    %v128 = vld [vmem:[#allocation2 + $0xf8] sm:$0xff]
    %v129 = vld [vmem:[#allocation2 + $0x100] sm:$0xff]
    %v130 = vld [vmem:[#allocation2 + $0x108] sm:$0xff]
    %v131 = vld [vmem:[#allocation2 + $0x110] sm:$0xff]
    %v132 = vld [vmem:[#allocation2 + $0x118] sm:$0xff]
    %v133 = vld [vmem:[#allocation2 + $0x120] sm:$0xff]
    %v134 = vld [vmem:[#allocation2 + $0x128] sm:$0xff]
    %v135 = vld [vmem:[#allocation2 + $0x130] sm:$0xff]
    %v136 = vld [vmem:[#allocation2 + $0x138] sm:$0xff]
    %v137 = vld [vmem:[#allocation2 + $0x140] sm:$0xff]
    %v138 = vld [vmem:[#allocation2 + $0x148] sm:$0xff]
    %v139 = vld [vmem:[#allocation2 + $0x150] sm:$0xff]
    %v140 = vld [vmem:[#allocation2 + $0x158] sm:$0xff]
    %v141 = vld [vmem:[#allocation2 + $0x160] sm:$0xff]
    %v142 = vld [vmem:[#allocation2 + $0x168] sm:$0xff]
    %v143 = vld [vmem:[#allocation2 + $0x170] sm:$0xff]
    %v144 = vld [vmem:[#allocation2 + $0x178] sm:$0xff]
    %v145 = vld [vmem:[#allocation2 + $0x180] sm:$0xff]
    %v146 = vld [vmem:[#allocation2 + $0x188] sm:$0xff]
    %v147 = vld [vmem:[#allocation2 + $0x190] sm:$0xff]
    %v148 = vld [vmem:[#allocation2 + $0x198] sm:$0xff]
    %v149 = vld [vmem:[#allocation2 + $0x1a0] sm:$0xff]
    %v150 = vld [vmem:[#allocation2 + $0x1a8] sm:$0xff]
    %v151 = vld [vmem:[#allocation2 + $0x1b0] sm:$0xff]
    %v152 = vld [vmem:[#allocation2 + $0x1b8] sm:$0xff]
    %v153 = vld [vmem:[#allocation2 + $0x1c0] sm:$0xff]
    %v154 = vld [vmem:[#allocation2 + $0x1c8] sm:$0xff]
    %v155 = vld [vmem:[#allocation2 + $0x1d0] sm:$0xff]
    %v156 = vld [vmem:[#allocation2 + $0x1d8] sm:$0xff]
    %v157 = vld [vmem:[#allocation2 + $0x1e0] sm:$0xff]
    %v158 = vld [vmem:[#allocation2 + $0x1e8] sm:$0xff]
    %v159 = vld [vmem:[#allocation2 + $0x1f0] sm:$0xff]
    %v160 = vld [vmem:[#allocation2 + $0x1f8] sm:$0xff]
    %v161 = vld [vmem:[#allocation2 + $0x200] sm:$0xff]
    %v162 = vld [vmem:[#allocation2 + $0x208] sm:$0xff]
    %v163 = vld [vmem:[#allocation2 + $0x210] sm:$0xff]
    %v164 = vld [vmem:[#allocation2 + $0x218] sm:$0xff]
    %v165 = vld [vmem:[#allocation2 + $0x220] sm:$0xff]
    %v166 = vld [vmem:[#allocation2 + $0x228] sm:$0xff]
    %v167 = vld [vmem:[#allocation2 + $0x230] sm:$0xff]
    %v168 = vld [vmem:[#allocation2 + $0x238] sm:$0xff]
    %v169 = vld [vmem:[#allocation2 + $0x240] sm:$0xff]
    %v170 = vld [vmem:[#allocation2 + $0x248] sm:$0xff]
    %v171 = vld [vmem:[#allocation2 + $0x250] sm:$0xff]
    %v172 = vld [vmem:[#allocation2 + $0x258] sm:$0xff]
    %v173 = vld [vmem:[#allocation2 + $0x260] sm:$0xff]
    %v174 = vld [vmem:[#allocation2 + $0x268] sm:$0xff]
    %v175 = vld [vmem:[#allocation2 + $0x270] sm:$0xff]
    %v176 = vld [vmem:[#allocation2 + $0x278] sm:$0xff]
    %v177 = vld [vmem:[#allocation2 + $0x280] sm:$0xff]
    %v178 = vld [vmem:[#allocation2 + $0x288] sm:$0xff]
    %v179 = vld [vmem:[#allocation2 + $0x290] sm:$0xff]
    %v180 = vld [vmem:[#allocation2 + $0x298] sm:$0xff]
    %v181 = vld [vmem:[#allocation2 + $0x2a0] sm:$0xff]
    %v182 = vld [vmem:[#allocation2 + $0x2a8] sm:$0xff]
    %v183 = vld [vmem:[#allocation2 + $0x2b0] sm:$0xff]
    %v184 = vld [vmem:[#allocation2 + $0x2b8] sm:$0xff]
    %v185 = vld [vmem:[#allocation2 + $0x2c0] sm:$0xff]
    %v186 = vld [vmem:[#allocation2 + $0x2c8] sm:$0xff]
    %v187 = vld [vmem:[#allocation2 + $0x2d0] sm:$0xff]
    %v188 = vld [vmem:[#allocation2 + $0x2d8] sm:$0xff]
    %v189 = vld [vmem:[#allocation2 + $0x2e0] sm:$0xff]
    %v190 = vld [vmem:[#allocation2 + $0x2e8] sm:$0xff]
    %v191 = vld [vmem:[#allocation2 + $0x2f0] sm:$0xff]
    %v192 = vld [vmem:[#allocation2 + $0x2f8] sm:$0xff]
    %v193 = vld [vmem:[#allocation2 + $0x300] sm:$0xff]
    %v194 = vld [vmem:[#allocation2 + $0x308] sm:$0xff]
    %v195 = vld [vmem:[#allocation2 + $0x310] sm:$0xff]
    %v196 = vld [vmem:[#allocation2 + $0x318] sm:$0xff]
    %v197 = vld [vmem:[#allocation2 + $0x320] sm:$0xff]
    %v198 = vld [vmem:[#allocation2 + $0x328] sm:$0xff]
    %v199 = vld [vmem:[#allocation2 + $0x330] sm:$0xff]
    %v200 = vld [vmem:[#allocation2 + $0x338] sm:$0xff]
    %v201 = vld [vmem:[#allocation2 + $0x340] sm:$0xff]
    %v202 = vld [vmem:[#allocation2 + $0x348] sm:$0xff]
    %v203 = vld [vmem:[#allocation2 + $0x350] sm:$0xff]
    %v204 = vld [vmem:[#allocation2 + $0x358] sm:$0xff]
    %v205 = vld [vmem:[#allocation2 + $0x360] sm:$0xff]
    %v206 = vld [vmem:[#allocation2 + $0x368] sm:$0xff]
    %v207 = vld [vmem:[#allocation2 + $0x370] sm:$0xff]
    %v208 = vld [vmem:[#allocation2 + $0x378] sm:$0xff]
    %v209 = vld [vmem:[#allocation2 + $0x380] sm:$0xff]
    %v210 = vld [vmem:[#allocation2 + $0x388] sm:$0xff]
    %v211 = vld [vmem:[#allocation2 + $0x390] sm:$0xff]
    %v212 = vld [vmem:[#allocation2 + $0x398] sm:$0xff]
    %v213 = vld [vmem:[#allocation2 + $0x3a0] sm:$0xff]
    %v214 = vld [vmem:[#allocation2 + $0x3a8] sm:$0xff]
    %v215 = vld [vmem:[#allocation2 + $0x3b0] sm:$0xff]
    %v216 = vld [vmem:[#allocation2 + $0x3b8] sm:$0xff]
    %v217 = vld [vmem:[#allocation2 + $0x3c0] sm:$0xff]
    %v218 = vld [vmem:[#allocation2 + $0x3c8] sm:$0xff]
    %v219 = vld [vmem:[#allocation2 + $0x3d0] sm:$0xff]
    %v220 = vld [vmem:[#allocation2 + $0x3d8] sm:$0xff]
    %v221 = vld [vmem:[#allocation2 + $0x3e0] sm:$0xff]
    %v222 = vld [vmem:[#allocation2 + $0x3e8] sm:$0xff]
    %v223 = vld [vmem:[#allocation2 + $0x3f0] sm:$0xff]
    %v224 = vld [vmem:[#allocation2 + $0x3f8] sm:$0xff]
    %v225 = vld [vmem:[%s2] sm:$0x3]
    %v227 = vlaneseq
    %v228 = vshrl.u32 %v227, 7
    %v229 = vsub.s32 0, %v228
    %v230 = vrot.slane %v225, %v229
    %v231 = vlaneseq
    %v232 = vshrl.u32 %v231, 7
    %v233 = vsub.s32 1, %v232
    %v234 = vrot.slane %v225, %v233
    %v365 = vunpack.c.l.b16 %v97
    %v366 = vunpack.c.h.b16 %v97
    %v367 = vunpack.c.l.b16 %v98
    %v368 = vunpack.c.h.b16 %v98
    %v369 = vunpack.c.l.b16 %v99
    %v370 = vunpack.c.h.b16 %v99
    %v371 = vunpack.c.l.b16 %v100
    %v372 = vunpack.c.h.b16 %v100
    %v373 = vunpack.c.l.b16 %v101
    %v374 = vunpack.c.h.b16 %v101
    %v375 = vunpack.c.l.b16 %v102
    %v376 = vunpack.c.h.b16 %v102
    %v377 = vunpack.c.l.b16 %v103
    %v378 = vunpack.c.h.b16 %v103
    %v379 = vunpack.c.l.b16 %v104
    %v380 = vunpack.c.h.b16 %v104
    %v381 = vunpack.c.l.b16 %v105
    %v382 = vunpack.c.h.b16 %v105
    %v383 = vunpack.c.l.b16 %v106
    %v384 = vunpack.c.h.b16 %v106
    %v385 = vunpack.c.l.b16 %v107
    %v386 = vunpack.c.h.b16 %v107
    %v387 = vunpack.c.l.b16 %v108
    %v388 = vunpack.c.h.b16 %v108
    %v389 = vunpack.c.l.b16 %v109
    %v390 = vunpack.c.h.b16 %v109
    %v391 = vunpack.c.l.b16 %v110
    %v392 = vunpack.c.h.b16 %v110
    %v393 = vunpack.c.l.b16 %v111
    %v394 = vunpack.c.h.b16 %v111
    %v395 = vunpack.c.l.b16 %v112
    %v396 = vunpack.c.h.b16 %v112
    %v397 = vunpack.c.l.b16 %v113
    %v398 = vunpack.c.h.b16 %v113
    %v399 = vunpack.c.l.b16 %v114
    %v400 = vunpack.c.h.b16 %v114
    %v401 = vunpack.c.l.b16 %v115
    %v402 = vunpack.c.h.b16 %v115
    %v403 = vunpack.c.l.b16 %v116
    %v404 = vunpack.c.h.b16 %v116
    %v405 = vunpack.c.l.b16 %v117
    %v406 = vunpack.c.h.b16 %v117
    %v407 = vunpack.c.l.b16 %v118
    %v408 = vunpack.c.h.b16 %v118
    %v409 = vunpack.c.l.b16 %v119
    %v410 = vunpack.c.h.b16 %v119
    %v411 = vunpack.c.l.b16 %v120
    %v412 = vunpack.c.h.b16 %v120
    %v413 = vunpack.c.l.b16 %v121
    %v414 = vunpack.c.h.b16 %v121
    %v415 = vunpack.c.l.b16 %v122
    %v416 = vunpack.c.h.b16 %v122
    %v417 = vunpack.c.l.b16 %v123
    %v418 = vunpack.c.h.b16 %v123
    %v419 = vunpack.c.l.b16 %v124
    %v420 = vunpack.c.h.b16 %v124
    %v421 = vunpack.c.l.b16 %v125
    %v422 = vunpack.c.h.b16 %v125
    %v423 = vunpack.c.l.b16 %v126
    %v424 = vunpack.c.h.b16 %v126
    %v425 = vunpack.c.l.b16 %v127
    %v426 = vunpack.c.h.b16 %v127
    %v427 = vunpack.c.l.b16 %v128
    %v428 = vunpack.c.h.b16 %v128
    %v429 = vunpack.c.l.b16 %v129
    %v430 = vunpack.c.h.b16 %v129
    %v431 = vunpack.c.l.b16 %v130
    %v432 = vunpack.c.h.b16 %v130
    %v433 = vunpack.c.l.b16 %v131
    %v434 = vunpack.c.h.b16 %v131
    %v435 = vunpack.c.l.b16 %v132
    %v436 = vunpack.c.h.b16 %v132
    %v437 = vunpack.c.l.b16 %v133
    %v438 = vunpack.c.h.b16 %v133
    %v439 = vunpack.c.l.b16 %v134
    %v440 = vunpack.c.h.b16 %v134
    %v441 = vunpack.c.l.b16 %v135
    %v442 = vunpack.c.h.b16 %v135
    %v443 = vunpack.c.l.b16 %v136
    %v444 = vunpack.c.h.b16 %v136
    %v445 = vunpack.c.l.b16 %v137
    %v446 = vunpack.c.h.b16 %v137
    %v447 = vunpack.c.l.b16 %v138
    %v448 = vunpack.c.h.b16 %v138
    %v449 = vunpack.c.l.b16 %v139
    %v450 = vunpack.c.h.b16 %v139
    %v451 = vunpack.c.l.b16 %v140
    %v452 = vunpack.c.h.b16 %v140
    %v453 = vunpack.c.l.b16 %v141
    %v454 = vunpack.c.h.b16 %v141
    %v455 = vunpack.c.l.b16 %v142
    %v456 = vunpack.c.h.b16 %v142
    %v457 = vunpack.c.l.b16 %v143
    %v458 = vunpack.c.h.b16 %v143
    %v459 = vunpack.c.l.b16 %v144
    %v460 = vunpack.c.h.b16 %v144
    %v461 = vunpack.c.l.b16 %v145
    %v462 = vunpack.c.h.b16 %v145
    %v463 = vunpack.c.l.b16 %v146
    %v464 = vunpack.c.h.b16 %v146
    %v465 = vunpack.c.l.b16 %v147
    %v466 = vunpack.c.h.b16 %v147
    %v467 = vunpack.c.l.b16 %v148
    %v468 = vunpack.c.h.b16 %v148
    %v469 = vunpack.c.l.b16 %v149
    %v470 = vunpack.c.h.b16 %v149
    %v471 = vunpack.c.l.b16 %v150
    %v472 = vunpack.c.h.b16 %v150
    %v473 = vunpack.c.l.b16 %v151
    %v474 = vunpack.c.h.b16 %v151
    %v475 = vunpack.c.l.b16 %v152
    %v476 = vunpack.c.h.b16 %v152
    %v477 = vunpack.c.l.b16 %v153
    %v478 = vunpack.c.h.b16 %v153
    %v479 = vunpack.c.l.b16 %v154
    %v480 = vunpack.c.h.b16 %v154
    %v481 = vunpack.c.l.b16 %v155
    %v482 = vunpack.c.h.b16 %v155
    %v483 = vunpack.c.l.b16 %v156
    %v484 = vunpack.c.h.b16 %v156
    %v485 = vunpack.c.l.b16 %v157
    %v486 = vunpack.c.h.b16 %v157
    %v487 = vunpack.c.l.b16 %v158
    %v488 = vunpack.c.h.b16 %v158
    %v489 = vunpack.c.l.b16 %v159
    %v490 = vunpack.c.h.b16 %v159
    %v491 = vunpack.c.l.b16 %v160
    %v492 = vunpack.c.h.b16 %v160
    %v493 = vunpack.c.l.b16 %v161
    %v494 = vunpack.c.h.b16 %v161
    %v495 = vunpack.c.l.b16 %v162
    %v496 = vunpack.c.h.b16 %v162
    %v497 = vunpack.c.l.b16 %v163
    %v498 = vunpack.c.h.b16 %v163
    %v499 = vunpack.c.l.b16 %v164
    %v500 = vunpack.c.h.b16 %v164
    %v501 = vunpack.c.l.b16 %v165
    %v502 = vunpack.c.h.b16 %v165
    %v503 = vunpack.c.l.b16 %v166
    %v504 = vunpack.c.h.b16 %v166
    %v505 = vunpack.c.l.b16 %v167
    %v506 = vunpack.c.h.b16 %v167
    %v507 = vunpack.c.l.b16 %v168
    %v508 = vunpack.c.h.b16 %v168
    %v509 = vunpack.c.l.b16 %v169
    %v510 = vunpack.c.h.b16 %v169
    %v511 = vunpack.c.l.b16 %v170
    %v512 = vunpack.c.h.b16 %v170
    %v513 = vunpack.c.l.b16 %v171
    %v514 = vunpack.c.h.b16 %v171
    %v515 = vunpack.c.l.b16 %v172
    %v516 = vunpack.c.h.b16 %v172
    %v517 = vunpack.c.l.b16 %v173
    %v518 = vunpack.c.h.b16 %v173
    %v519 = vunpack.c.l.b16 %v174
    %v520 = vunpack.c.h.b16 %v174
    %v521 = vunpack.c.l.b16 %v175
    %v522 = vunpack.c.h.b16 %v175
    %v523 = vunpack.c.l.b16 %v176
    %v524 = vunpack.c.h.b16 %v176
    %v525 = vunpack.c.l.b16 %v177
    %v526 = vunpack.c.h.b16 %v177
    %v527 = vunpack.c.l.b16 %v178
    %v528 = vunpack.c.h.b16 %v178
    %v529 = vunpack.c.l.b16 %v179
    %v530 = vunpack.c.h.b16 %v179
    %v531 = vunpack.c.l.b16 %v180
    %v532 = vunpack.c.h.b16 %v180
    %v533 = vunpack.c.l.b16 %v181
    %v534 = vunpack.c.h.b16 %v181
    %v535 = vunpack.c.l.b16 %v182
    %v536 = vunpack.c.h.b16 %v182
    %v537 = vunpack.c.l.b16 %v183
    %v538 = vunpack.c.h.b16 %v183
    %v539 = vunpack.c.l.b16 %v184
    %v540 = vunpack.c.h.b16 %v184
    %v541 = vunpack.c.l.b16 %v185
    %v542 = vunpack.c.h.b16 %v185
    %v543 = vunpack.c.l.b16 %v186
    %v544 = vunpack.c.h.b16 %v186
    %v545 = vunpack.c.l.b16 %v187
    %v546 = vunpack.c.h.b16 %v187
    %v547 = vunpack.c.l.b16 %v188
    %v548 = vunpack.c.h.b16 %v188
    %v549 = vunpack.c.l.b16 %v189
    %v550 = vunpack.c.h.b16 %v189
    %v551 = vunpack.c.l.b16 %v190
    %v552 = vunpack.c.h.b16 %v190
    %v553 = vunpack.c.l.b16 %v191
    %v554 = vunpack.c.h.b16 %v191
    %v555 = vunpack.c.l.b16 %v192
    %v556 = vunpack.c.h.b16 %v192
    %v557 = vunpack.c.l.b16 %v193
    %v558 = vunpack.c.h.b16 %v193
    %v559 = vunpack.c.l.b16 %v194
    %v560 = vunpack.c.h.b16 %v194
    %v561 = vunpack.c.l.b16 %v195
    %v562 = vunpack.c.h.b16 %v195
    %v563 = vunpack.c.l.b16 %v196
    %v564 = vunpack.c.h.b16 %v196
    %v565 = vunpack.c.l.b16 %v197
    %v566 = vunpack.c.h.b16 %v197
    %v567 = vunpack.c.l.b16 %v198
    %v568 = vunpack.c.h.b16 %v198
    %v569 = vunpack.c.l.b16 %v199
    %v570 = vunpack.c.h.b16 %v199
    %v571 = vunpack.c.l.b16 %v200
    %v572 = vunpack.c.h.b16 %v200
    %v573 = vunpack.c.l.b16 %v201
    %v574 = vunpack.c.h.b16 %v201
    %v575 = vunpack.c.l.b16 %v202
    %v576 = vunpack.c.h.b16 %v202
    %v577 = vunpack.c.l.b16 %v203
    %v578 = vunpack.c.h.b16 %v203
    %v579 = vunpack.c.l.b16 %v204
    %v580 = vunpack.c.h.b16 %v204
    %v581 = vunpack.c.l.b16 %v205
    %v582 = vunpack.c.h.b16 %v205
    %v583 = vunpack.c.l.b16 %v206
    %v584 = vunpack.c.h.b16 %v206
    %v585 = vunpack.c.l.b16 %v207
    %v586 = vunpack.c.h.b16 %v207
    %v587 = vunpack.c.l.b16 %v208
    %v588 = vunpack.c.h.b16 %v208
    %v589 = vunpack.c.l.b16 %v209
    %v590 = vunpack.c.h.b16 %v209
    %v591 = vunpack.c.l.b16 %v210
    %v592 = vunpack.c.h.b16 %v210
    %v593 = vunpack.c.l.b16 %v211
    %v594 = vunpack.c.h.b16 %v211
    %v595 = vunpack.c.l.b16 %v212
    %v596 = vunpack.c.h.b16 %v212
    %v597 = vunpack.c.l.b16 %v213
    %v598 = vunpack.c.h.b16 %v213
    %v599 = vunpack.c.l.b16 %v214
    %v600 = vunpack.c.h.b16 %v214
    %v601 = vunpack.c.l.b16 %v215
    %v602 = vunpack.c.h.b16 %v215
    %v603 = vunpack.c.l.b16 %v216
    %v604 = vunpack.c.h.b16 %v216
    %v605 = vunpack.c.l.b16 %v217
    %v606 = vunpack.c.h.b16 %v217
    %v607 = vunpack.c.l.b16 %v218
    %v608 = vunpack.c.h.b16 %v218
    %v609 = vunpack.c.l.b16 %v219
    %v610 = vunpack.c.h.b16 %v219
    %v611 = vunpack.c.l.b16 %v220
    %v612 = vunpack.c.h.b16 %v220
    %v613 = vunpack.c.l.b16 %v221
    %v614 = vunpack.c.h.b16 %v221
    %v615 = vunpack.c.l.b16 %v222
    %v616 = vunpack.c.h.b16 %v222
    %v617 = vunpack.c.l.b16 %v223
    %v618 = vunpack.c.h.b16 %v223
    %v619 = vunpack.c.l.b16 %v224
    %v620 = vunpack.c.h.b16 %v224
    %v621 = vpack.c.b16 %v367, %v365
    %v622 = vpack.c.b16 %v368, %v366
    %v623 = vpack.c.b16 %v371, %v369
    %v624 = vpack.c.b16 %v372, %v370
    %v625 = vpack.c.b16 %v375, %v373
    %v626 = vpack.c.b16 %v376, %v374
    %v627 = vpack.c.b16 %v379, %v377
    %v628 = vpack.c.b16 %v380, %v378
    %v629 = vpack.c.b16 %v383, %v381
    %v630 = vpack.c.b16 %v384, %v382
    %v631 = vpack.c.b16 %v387, %v385
    %v632 = vpack.c.b16 %v388, %v386
    %v633 = vpack.c.b16 %v391, %v389
    %v634 = vpack.c.b16 %v392, %v390
    %v635 = vpack.c.b16 %v395, %v393
    %v636 = vpack.c.b16 %v396, %v394
    %v637 = vpack.c.b16 %v399, %v397
    %v638 = vpack.c.b16 %v400, %v398
    %v639 = vpack.c.b16 %v403, %v401
    %v640 = vpack.c.b16 %v404, %v402
    %v641 = vpack.c.b16 %v407, %v405
    %v642 = vpack.c.b16 %v408, %v406
    %v643 = vpack.c.b16 %v411, %v409
    %v644 = vpack.c.b16 %v412, %v410
    %v645 = vpack.c.b16 %v415, %v413
    %v646 = vpack.c.b16 %v416, %v414
    %v647 = vpack.c.b16 %v419, %v417
    %v648 = vpack.c.b16 %v420, %v418
    %v649 = vpack.c.b16 %v423, %v421
    %v650 = vpack.c.b16 %v424, %v422
    %v651 = vpack.c.b16 %v427, %v425
    %v652 = vpack.c.b16 %v428, %v426
    %v653 = vpack.c.b16 %v431, %v429
    %v654 = vpack.c.b16 %v432, %v430
    %v655 = vpack.c.b16 %v435, %v433
    %v656 = vpack.c.b16 %v436, %v434
    %v657 = vpack.c.b16 %v439, %v437
    %v658 = vpack.c.b16 %v440, %v438
    %v659 = vpack.c.b16 %v443, %v441
    %v660 = vpack.c.b16 %v444, %v442
    %v661 = vpack.c.b16 %v447, %v445
    %v662 = vpack.c.b16 %v448, %v446
    %v663 = vpack.c.b16 %v451, %v449
    %v664 = vpack.c.b16 %v452, %v450
    %v665 = vpack.c.b16 %v455, %v453
    %v666 = vpack.c.b16 %v456, %v454
    %v667 = vpack.c.b16 %v459, %v457
    %v668 = vpack.c.b16 %v460, %v458
    %v669 = vpack.c.b16 %v463, %v461
    %v670 = vpack.c.b16 %v464, %v462
    %v671 = vpack.c.b16 %v467, %v465
    %v672 = vpack.c.b16 %v468, %v466
    %v673 = vpack.c.b16 %v471, %v469
    %v674 = vpack.c.b16 %v472, %v470
    %v675 = vpack.c.b16 %v475, %v473
    %v676 = vpack.c.b16 %v476, %v474
    %v677 = vpack.c.b16 %v479, %v477
    %v678 = vpack.c.b16 %v480, %v478
    %v679 = vpack.c.b16 %v483, %v481
    %v680 = vpack.c.b16 %v484, %v482
    %v681 = vpack.c.b16 %v487, %v485
    %v682 = vpack.c.b16 %v488, %v486
    %v683 = vpack.c.b16 %v491, %v489
    %v684 = vpack.c.b16 %v492, %v490
    %v685 = vpack.c.b16 %v495, %v493
    %v686 = vpack.c.b16 %v496, %v494
    %v687 = vpack.c.b16 %v499, %v497
    %v688 = vpack.c.b16 %v500, %v498
    %v689 = vpack.c.b16 %v503, %v501
    %v690 = vpack.c.b16 %v504, %v502
    %v691 = vpack.c.b16 %v507, %v505
    %v692 = vpack.c.b16 %v508, %v506
    %v693 = vpack.c.b16 %v511, %v509
    %v694 = vpack.c.b16 %v512, %v510
    %v695 = vpack.c.b16 %v515, %v513
    %v696 = vpack.c.b16 %v516, %v514
    %v697 = vpack.c.b16 %v519, %v517
    %v698 = vpack.c.b16 %v520, %v518
    %v699 = vpack.c.b16 %v523, %v521
    %v700 = vpack.c.b16 %v524, %v522
    %v701 = vpack.c.b16 %v527, %v525
    %v702 = vpack.c.b16 %v528, %v526
    %v703 = vpack.c.b16 %v531, %v529
    %v704 = vpack.c.b16 %v532, %v530
    %v705 = vpack.c.b16 %v535, %v533
    %v706 = vpack.c.b16 %v536, %v534
    %v707 = vpack.c.b16 %v539, %v537
    %v708 = vpack.c.b16 %v540, %v538
    %v709 = vpack.c.b16 %v543, %v541
    %v710 = vpack.c.b16 %v544, %v542
    %v711 = vpack.c.b16 %v547, %v545
    %v712 = vpack.c.b16 %v548, %v546
    %v713 = vpack.c.b16 %v551, %v549
    %v714 = vpack.c.b16 %v552, %v550
    %v715 = vpack.c.b16 %v555, %v553
    %v716 = vpack.c.b16 %v556, %v554
    %v717 = vpack.c.b16 %v559, %v557
    %v718 = vpack.c.b16 %v560, %v558
    %v719 = vpack.c.b16 %v563, %v561
    %v720 = vpack.c.b16 %v564, %v562
    %v721 = vpack.c.b16 %v567, %v565
    %v722 = vpack.c.b16 %v568, %v566
    %v723 = vpack.c.b16 %v571, %v569
    %v724 = vpack.c.b16 %v572, %v570
    %v725 = vpack.c.b16 %v575, %v573
    %v726 = vpack.c.b16 %v576, %v574
    %v727 = vpack.c.b16 %v579, %v577
    %v728 = vpack.c.b16 %v580, %v578
    %v729 = vpack.c.b16 %v583, %v581
    %v730 = vpack.c.b16 %v584, %v582
    %v731 = vpack.c.b16 %v587, %v585
    %v732 = vpack.c.b16 %v588, %v586
    %v733 = vpack.c.b16 %v591, %v589
    %v734 = vpack.c.b16 %v592, %v590
    %v735 = vpack.c.b16 %v595, %v593
    %v736 = vpack.c.b16 %v596, %v594
    %v737 = vpack.c.b16 %v599, %v597
    %v738 = vpack.c.b16 %v600, %v598
    %v739 = vpack.c.b16 %v603, %v601
    %v740 = vpack.c.b16 %v604, %v602
    %v741 = vpack.c.b16 %v607, %v605
    %v742 = vpack.c.b16 %v608, %v606
    %v743 = vpack.c.b16 %v611, %v609
    %v744 = vpack.c.b16 %v612, %v610
    %v745 = vpack.c.b16 %v615, %v613
    %v746 = vpack.c.b16 %v616, %v614
    %v747 = vpack.c.b16 %v619, %v617
    %v748 = vpack.c.b16 %v620, %v618
    %877 = vmatprep.subr.bf16.mxu0 %v622
    %878 = vmatpush1.bf16.msra.mxu0 %v621
    %879 = vmatprep.subr.bf16.mxu0 %v624
    %880 = vmatpush1.bf16.msra.mxu0 %v623
    %881 = vmatprep.subr.bf16.mxu0 %v626
    %882 = vmatpush1.bf16.msra.mxu0 %v625
    %883 = vmatprep.subr.bf16.mxu0 %v628
    %884 = vmatpush1.bf16.msra.mxu0 %v627
    %885 = vmatprep.subr.bf16.mxu0 %v630
    %886 = vmatpush1.bf16.msra.mxu0 %v629
    %887 = vmatprep.subr.bf16.mxu0 %v632
    %888 = vmatpush1.bf16.msra.mxu0 %v631
    %889 = vmatprep.subr.bf16.mxu0 %v634
    %890 = vmatpush1.bf16.msra.mxu0 %v633
    %891 = vmatprep.subr.bf16.mxu0 %v636
    %892 = vmatpush1.bf16.msra.mxu0 %v635
    %893 = vmatprep.subr.bf16.mxu0 %v638
    %894 = vmatpush1.bf16.msra.mxu0 %v637
    %895 = vmatprep.subr.bf16.mxu0 %v640
    %896 = vmatpush1.bf16.msra.mxu0 %v639
    %897 = vmatprep.subr.bf16.mxu0 %v642
    %898 = vmatpush1.bf16.msra.mxu0 %v641
    %899 = vmatprep.subr.bf16.mxu0 %v644
    %900 = vmatpush1.bf16.msra.mxu0 %v643
    %901 = vmatprep.subr.bf16.mxu0 %v646
    %902 = vmatpush1.bf16.msra.mxu0 %v645
    %903 = vmatprep.subr.bf16.mxu0 %v648
    %904 = vmatpush1.bf16.msra.mxu0 %v647
    %905 = vmatprep.subr.bf16.mxu0 %v650
    %906 = vmatpush1.bf16.msra.mxu0 %v649
    %907 = vmatprep.subr.bf16.mxu0 %v652
    %908 = vmatpush1.bf16.msra.mxu0 %v651
    %909 = vmatprep.mubr.bf16.mxu0 %v90
    %910 = vmatmul.mubr.bf16.gmra.mrb[0].mxu0 %v89
    %v911 = vpop.f32.mrb[0].mxu0
    %v912 = vadd.f32 %v230, %v911
    %v913 = vpop.f32.mrb[0].mxu0
    %v914 = vadd.f32 %v234, %v913
    %v915 = vpop.f32.mrb[0].mxu0
    %v916 = vadd.f32 %v230, %v915
    %v917 = vpop.f32.mrb[0].mxu0
    %v918 = vadd.f32 %v234, %v917
    %919 = vdwg.mxu0
    %920 = vmatprep.subr.bf16.mxu0 %v654
    %921 = vmatpush1.bf16.msra.mxu0 %v653
    %922 = vmatprep.subr.bf16.mxu0 %v656
    %923 = vmatpush1.bf16.msra.mxu0 %v655
    %924 = vmatprep.subr.bf16.mxu0 %v658
    %925 = vmatpush1.bf16.msra.mxu0 %v657
    %926 = vmatprep.subr.bf16.mxu0 %v660
    %927 = vmatpush1.bf16.msra.mxu0 %v659
    %928 = vmatprep.subr.bf16.mxu0 %v662
    %929 = vmatpush1.bf16.msra.mxu0 %v661
    %930 = vmatprep.subr.bf16.mxu0 %v664
    %931 = vmatpush1.bf16.msra.mxu0 %v663
    %932 = vmatprep.subr.bf16.mxu0 %v666
    %933 = vmatpush1.bf16.msra.mxu0 %v665
    %934 = vmatprep.subr.bf16.mxu0 %v668
    %935 = vmatpush1.bf16.msra.mxu0 %v667
    %936 = vmatprep.subr.bf16.mxu0 %v670
    %937 = vmatpush1.bf16.msra.mxu0 %v669
    %938 = vmatprep.subr.bf16.mxu0 %v672
    %939 = vmatpush1.bf16.msra.mxu0 %v671
    %940 = vmatprep.subr.bf16.mxu0 %v674
    %941 = vmatpush1.bf16.msra.mxu0 %v673
    %942 = vmatprep.subr.bf16.mxu0 %v676
    %943 = vmatpush1.bf16.msra.mxu0 %v675
    %944 = vmatprep.subr.bf16.mxu0 %v678
    %945 = vmatpush1.bf16.msra.mxu0 %v677
    %946 = vmatprep.subr.bf16.mxu0 %v680
    %947 = vmatpush1.bf16.msra.mxu0 %v679
    %948 = vmatprep.subr.bf16.mxu0 %v682
    %949 = vmatpush1.bf16.msra.mxu0 %v681
    %950 = vmatprep.subr.bf16.mxu0 %v684
    %951 = vmatpush1.bf16.msra.mxu0 %v683
    %952 = vmatprep.mubr.bf16.mxu0 %v92
    %953 = vmatmul.mubr.bf16.gmra.mrb[0].mxu0 %v91
    %v954 = vpop.f32.mrb[0].mxu0
    %v955 = vadd.f32 %v912, %v954
    %v956 = vpop.f32.mrb[0].mxu0
    %v957 = vadd.f32 %v914, %v956
    %v958 = vpop.f32.mrb[0].mxu0
    %v959 = vadd.f32 %v916, %v958
    %v960 = vpop.f32.mrb[0].mxu0
    %v961 = vadd.f32 %v918, %v960
    %962 = vdwg.mxu0
    %963 = vmatprep.subr.bf16.mxu0 %v686
    %964 = vmatpush1.bf16.msra.mxu0 %v685
    %965 = vmatprep.subr.bf16.mxu0 %v688
    %966 = vmatpush1.bf16.msra.mxu0 %v687
    %967 = vmatprep.subr.bf16.mxu0 %v690
    %968 = vmatpush1.bf16.msra.mxu0 %v689
    %969 = vmatprep.subr.bf16.mxu0 %v692
    %970 = vmatpush1.bf16.msra.mxu0 %v691
    %971 = vmatprep.subr.bf16.mxu0 %v694
    %972 = vmatpush1.bf16.msra.mxu0 %v693
    %973 = vmatprep.subr.bf16.mxu0 %v696
    %974 = vmatpush1.bf16.msra.mxu0 %v695
    %975 = vmatprep.subr.bf16.mxu0 %v698
    %976 = vmatpush1.bf16.msra.mxu0 %v697
    %977 = vmatprep.subr.bf16.mxu0 %v700
    %978 = vmatpush1.bf16.msra.mxu0 %v699
    %979 = vmatprep.subr.bf16.mxu0 %v702
    %980 = vmatpush1.bf16.msra.mxu0 %v701
    %981 = vmatprep.subr.bf16.mxu0 %v704
    %982 = vmatpush1.bf16.msra.mxu0 %v703
    %983 = vmatprep.subr.bf16.mxu0 %v706
    %984 = vmatpush1.bf16.msra.mxu0 %v705
    %985 = vmatprep.subr.bf16.mxu0 %v708
    %986 = vmatpush1.bf16.msra.mxu0 %v707
    %987 = vmatprep.subr.bf16.mxu0 %v710
    %988 = vmatpush1.bf16.msra.mxu0 %v709
    %989 = vmatprep.subr.bf16.mxu0 %v712
    %990 = vmatpush1.bf16.msra.mxu0 %v711
    %991 = vmatprep.subr.bf16.mxu0 %v714
    %992 = vmatpush1.bf16.msra.mxu0 %v713
    %993 = vmatprep.subr.bf16.mxu0 %v716
    %994 = vmatpush1.bf16.msra.mxu0 %v715
    %995 = vmatprep.mubr.bf16.mxu0 %v94
    %996 = vmatmul.mubr.bf16.gmra.mrb[0].mxu0 %v93
    %v997 = vpop.f32.mrb[0].mxu0
    %v998 = vadd.f32 %v955, %v997
    %v999 = vpop.f32.mrb[0].mxu0
    %v1000 = vadd.f32 %v957, %v999
    %v1001 = vpop.f32.mrb[0].mxu0
    %v1002 = vadd.f32 %v959, %v1001
    %v1003 = vpop.f32.mrb[0].mxu0
    %v1004 = vadd.f32 %v961, %v1003
    %1005 = vdwg.mxu0
    %1006 = vmatprep.subr.bf16.mxu0 %v718
    %1007 = vmatpush1.bf16.msra.mxu0 %v717
    %1008 = vmatprep.subr.bf16.mxu0 %v720
    %1009 = vmatpush1.bf16.msra.mxu0 %v719
    %1010 = vmatprep.subr.bf16.mxu0 %v722
    %1011 = vmatpush1.bf16.msra.mxu0 %v721
    %1012 = vmatprep.subr.bf16.mxu0 %v724
    %1013 = vmatpush1.bf16.msra.mxu0 %v723
    %1014 = vmatprep.subr.bf16.mxu0 %v726
    %1015 = vmatpush1.bf16.msra.mxu0 %v725
    %1016 = vmatprep.subr.bf16.mxu0 %v728
    %1017 = vmatpush1.bf16.msra.mxu0 %v727
    %1018 = vmatprep.subr.bf16.mxu0 %v730
    %1019 = vmatpush1.bf16.msra.mxu0 %v729
    %1020 = vmatprep.subr.bf16.mxu0 %v732
    %1021 = vmatpush1.bf16.msra.mxu0 %v731
    %1022 = vmatprep.subr.bf16.mxu0 %v734
    %1023 = vmatpush1.bf16.msra.mxu0 %v733
    %1024 = vmatprep.subr.bf16.mxu0 %v736
    %1025 = vmatpush1.bf16.msra.mxu0 %v735
    %1026 = vmatprep.subr.bf16.mxu0 %v738
    %1027 = vmatpush1.bf16.msra.mxu0 %v737
    %1028 = vmatprep.subr.bf16.mxu0 %v740
    %1029 = vmatpush1.bf16.msra.mxu0 %v739
    %1030 = vmatprep.subr.bf16.mxu0 %v742
    %1031 = vmatpush1.bf16.msra.mxu0 %v741
    %1032 = vmatprep.subr.bf16.mxu0 %v744
    %1033 = vmatpush1.bf16.msra.mxu0 %v743
    %1034 = vmatprep.subr.bf16.mxu0 %v746
    %1035 = vmatpush1.bf16.msra.mxu0 %v745
    %1036 = vmatprep.subr.bf16.mxu0 %v748
    %1037 = vmatpush1.bf16.msra.mxu0 %v747
    %1038 = vmatprep.mubr.bf16.mxu0 %v96
    %1039 = vmatmul.mubr.bf16.gmra.mrb[0].mxu0 %v95
    %v1040 = vpop.f32.mrb[0].mxu0
    %v1041 = vadd.f32 %v998, %v1040
    %v1042 = vpop.f32.mrb[0].mxu0
    %v1043 = vadd.f32 %v1000, %v1042
    %v1044 = vpop.f32.mrb[0].mxu0
    %v1045 = vadd.f32 %v1002, %v1044
    %v1046 = vpop.f32.mrb[0].mxu0
    %v1047 = vadd.f32 %v1004, %v1046
    %1048 = vdwg.mxu0
    %v1049 = vmax.f32 %v1041, 0.0
    %v1050 = vmax.f32 %v1043, 0.0
    %v1051 = vmax.f32 %v1045, 0.0
    %v1052 = vmax.f32 %v1047, 0.0
    %v1053 = vpack.c.bf16 %v1051, %v1049
    %v1054 = vpack.c.bf16 %v1052, %v1050
    %v1055 = vld [vmem:[%s3] sm:$0xf]
    %v1056 = vld [vmem:[%s3 + $0x4] sm:$0xf]
    %v1057 = vld [vmem:[%s3 + $0x8] sm:$0xf]
    %v1058 = vld [vmem:[%s3 + $0xc] sm:$0xf]
    %v1059 = vld [vmem:[%s3 + $0x10] sm:$0xf]
    %v1060 = vld [vmem:[%s3 + $0x14] sm:$0xf]
    %v1061 = vld [vmem:[%s3 + $0x18] sm:$0xf]
    %v1062 = vld [vmem:[%s3 + $0x1c] sm:$0xf]
    %v1063 = vld [vmem:[%s3 + $0x20] sm:$0xf]
    %v1064 = vld [vmem:[%s3 + $0x24] sm:$0xf]
    %v1065 = vld [vmem:[%s3 + $0x28] sm:$0xf]
    %v1066 = vld [vmem:[%s3 + $0x2c] sm:$0xf]
    %v1067 = vld [vmem:[%s3 + $0x30] sm:$0xf]
    %v1068 = vld [vmem:[%s3 + $0x34] sm:$0xf]
    %v1069 = vld [vmem:[%s3 + $0x38] sm:$0xf]
    %v1070 = vld [vmem:[%s3 + $0x3c] sm:$0xf]
    %v1071 = vld [vmem:[%s3 + $0x40] sm:$0xf]
    %v1072 = vld [vmem:[%s3 + $0x44] sm:$0xf]
    %v1073 = vld [vmem:[%s3 + $0x48] sm:$0xf]
    %v1074 = vld [vmem:[%s3 + $0x4c] sm:$0xf]
    %v1075 = vld [vmem:[%s3 + $0x50] sm:$0xf]
    %v1076 = vld [vmem:[%s3 + $0x54] sm:$0xf]
    %v1077 = vld [vmem:[%s3 + $0x58] sm:$0xf]
    %v1078 = vld [vmem:[%s3 + $0x5c] sm:$0xf]
    %v1079 = vld [vmem:[%s3 + $0x60] sm:$0xf]
    %v1080 = vld [vmem:[%s3 + $0x64] sm:$0xf]
    %v1081 = vld [vmem:[%s3 + $0x68] sm:$0xf]
    %v1082 = vld [vmem:[%s3 + $0x6c] sm:$0xf]
    %v1083 = vld [vmem:[%s3 + $0x70] sm:$0xf]
    %v1084 = vld [vmem:[%s3 + $0x74] sm:$0xf]
    %v1085 = vld [vmem:[%s3 + $0x78] sm:$0xf]
    %v1086 = vld [vmem:[%s3 + $0x7c] sm:$0xf]
    %v1087 = vld [vmem:[%s4] sm:$0x1]
    %v1089 = vlaneseq
    %v1090 = vshrl.u32 %v1089, 7
    %v1091 = vsub.s32 0, %v1090
    %v1092 = vrot.slane %v1087, %v1091
    %v1126 = vunpack.c.l.b16 %v1055
    %v1127 = vunpack.c.l.b16 %v1056
    %v1128 = vunpack.c.l.b16 %v1057
    %v1129 = vunpack.c.l.b16 %v1058
    %v1130 = vunpack.c.l.b16 %v1059
    %v1131 = vunpack.c.l.b16 %v1060
    %v1132 = vunpack.c.l.b16 %v1061
    %v1133 = vunpack.c.l.b16 %v1062
    %v1134 = vunpack.c.l.b16 %v1063
    %v1135 = vunpack.c.l.b16 %v1064
    %v1136 = vunpack.c.l.b16 %v1065
    %v1137 = vunpack.c.l.b16 %v1066
    %v1138 = vunpack.c.l.b16 %v1067
    %v1139 = vunpack.c.l.b16 %v1068
    %v1140 = vunpack.c.l.b16 %v1069
    %v1141 = vunpack.c.l.b16 %v1070
    %v1142 = vunpack.c.l.b16 %v1071
    %v1143 = vunpack.c.l.b16 %v1072
    %v1144 = vunpack.c.l.b16 %v1073
    %v1145 = vunpack.c.l.b16 %v1074
    %v1146 = vunpack.c.l.b16 %v1075
    %v1147 = vunpack.c.l.b16 %v1076
    %v1148 = vunpack.c.l.b16 %v1077
    %v1149 = vunpack.c.l.b16 %v1078
    %v1150 = vunpack.c.l.b16 %v1079
    %v1151 = vunpack.c.l.b16 %v1080
    %v1152 = vunpack.c.l.b16 %v1081
    %v1153 = vunpack.c.l.b16 %v1082
    %v1154 = vunpack.c.l.b16 %v1083
    %v1155 = vunpack.c.l.b16 %v1084
    %v1156 = vunpack.c.l.b16 %v1085
    %v1157 = vunpack.c.l.b16 %v1086
    %v1158 = vpack.c.b16 %v1127, %v1126
    %v1159 = vpack.c.b16 %v1129, %v1128
    %v1160 = vpack.c.b16 %v1131, %v1130
    %v1161 = vpack.c.b16 %v1133, %v1132
    %v1162 = vpack.c.b16 %v1135, %v1134
    %v1163 = vpack.c.b16 %v1137, %v1136
    %v1164 = vpack.c.b16 %v1139, %v1138
    %v1165 = vpack.c.b16 %v1141, %v1140
    %v1166 = vpack.c.b16 %v1143, %v1142
    %v1167 = vpack.c.b16 %v1145, %v1144
    %v1168 = vpack.c.b16 %v1147, %v1146
    %v1169 = vpack.c.b16 %v1149, %v1148
    %v1170 = vpack.c.b16 %v1151, %v1150
    %v1171 = vpack.c.b16 %v1153, %v1152
    %v1172 = vpack.c.b16 %v1155, %v1154
    %v1173 = vpack.c.b16 %v1157, %v1156
    %1190 = vmatprep.subr.bf16.mxu0 0
    %1191 = vmatpush1.bf16.msra.mxu0 %v1158
    %1192 = vmatprep.subr.bf16.mxu0 0
    %1193 = vmatpush1.bf16.msra.mxu0 %v1159
    %1194 = vmatprep.subr.bf16.mxu0 0
    %1195 = vmatpush1.bf16.msra.mxu0 %v1160
    %1196 = vmatprep.subr.bf16.mxu0 0
    %1197 = vmatpush1.bf16.msra.mxu0 %v1161
    %1198 = vmatprep.subr.bf16.mxu0 0
    %1199 = vmatpush1.bf16.msra.mxu0 %v1162
    %1200 = vmatprep.subr.bf16.mxu0 0
    %1201 = vmatpush1.bf16.msra.mxu0 %v1163
    %1202 = vmatprep.subr.bf16.mxu0 0
    %1203 = vmatpush1.bf16.msra.mxu0 %v1164
    %1204 = vmatprep.subr.bf16.mxu0 0
    %1205 = vmatpush1.bf16.msra.mxu0 %v1165
    %1206 = vmatprep.subr.bf16.mxu0 0
    %1207 = vmatpush1.bf16.msra.mxu0 %v1166
    %1208 = vmatprep.subr.bf16.mxu0 0
    %1209 = vmatpush1.bf16.msra.mxu0 %v1167
    %1210 = vmatprep.subr.bf16.mxu0 0
    %1211 = vmatpush1.bf16.msra.mxu0 %v1168
    %1212 = vmatprep.subr.bf16.mxu0 0
    %1213 = vmatpush1.bf16.msra.mxu0 %v1169
    %1214 = vmatprep.subr.bf16.mxu0 0
    %1215 = vmatpush1.bf16.msra.mxu0 %v1170
    %1216 = vmatprep.subr.bf16.mxu0 0
    %1217 = vmatpush1.bf16.msra.mxu0 %v1171
    %1218 = vmatprep.subr.bf16.mxu0 0
    %1219 = vmatpush1.bf16.msra.mxu0 %v1172
    %1220 = vmatprep.subr.bf16.mxu0 0
    %1221 = vmatpush1.bf16.msra.mxu0 %v1173
    %1222 = vmatprep.mubr.bf16.mxu0 %v1054
    %1223 = vmatmul.mubr.bf16.gmra.mrb[0].mxu0 %v1053
    %v1224 = vpop.f32.mrb[0].mxu0
    %v1225 = vadd.f32 %v1092, %v1224
    %v1226 = vpop.f32.mrb[0].mxu0
    %v1227 = vpop.f32.mrb[0].mxu0
    %v1228 = vadd.f32 %v1092, %v1227
    %v1229 = vpop.f32.mrb[0].mxu0
    %1230 = vdwg.mxu0
    %v1231 = vmax.f32 %v1225, 0.0
    %v1232 = vmax.f32 %v1228, 0.0
    %v1233 = vpack.c.bf16 %v1232, %v1231
    %v1234 = vld [vmem:[%s5] sm:$0xf]
    %v1235 = vld [vmem:[%s5 + $0x4] sm:$0xf]
    %v1236 = vld [vmem:[%s5 + $0x8] sm:$0xf]
    %v1237 = vld [vmem:[%s5 + $0xc] sm:$0xf]
    %v1238 = vld [vmem:[%s5 + $0x10] sm:$0xf]
    %v1239 = vld [vmem:[%s5 + $0x14] sm:$0xf]
    %v1240 = vld [vmem:[%s5 + $0x18] sm:$0xf]
    %v1241 = vld [vmem:[%s5 + $0x1c] sm:$0xf]
    %v1242 = vld [vmem:[%s5 + $0x20] sm:$0xf]
    %v1243 = vld [vmem:[%s5 + $0x24] sm:$0xf]
    %v1244 = vld [vmem:[%s5 + $0x28] sm:$0xf]
    %v1245 = vld [vmem:[%s5 + $0x2c] sm:$0xf]
    %v1246 = vld [vmem:[%s5 + $0x30] sm:$0xf]
    %v1247 = vld [vmem:[%s5 + $0x34] sm:$0xf]
    %v1248 = vld [vmem:[%s5 + $0x38] sm:$0xf]
    %v1249 = vld [vmem:[%s5 + $0x3c] sm:$0xf]
    %v1250 = vld [vmem:[%s6] sm:$0x1]
    %v1252 = vlaneseq
    %v1253 = vshrl.u32 %v1252, 7
    %v1254 = vsub.s32 0, %v1253
    %v1255 = vrot.slane %v1250, %v1254
    %v1273 = vunpack.c.l.b16 %v1234
    %v1274 = vunpack.c.l.b16 %v1235
    %v1275 = vunpack.c.l.b16 %v1236
    %v1276 = vunpack.c.l.b16 %v1237
    %v1277 = vunpack.c.l.b16 %v1238
    %v1278 = vunpack.c.l.b16 %v1239
    %v1279 = vunpack.c.l.b16 %v1240
    %v1280 = vunpack.c.l.b16 %v1241
    %v1281 = vunpack.c.l.b16 %v1242
    %v1282 = vunpack.c.l.b16 %v1243
    %v1283 = vunpack.c.l.b16 %v1244
    %v1284 = vunpack.c.l.b16 %v1245
    %v1285 = vunpack.c.l.b16 %v1246
    %v1286 = vunpack.c.l.b16 %v1247
    %v1287 = vunpack.c.l.b16 %v1248
    %v1288 = vunpack.c.l.b16 %v1249
    %v1289 = vpack.c.b16 %v1274, %v1273
    %v1290 = vpack.c.b16 %v1276, %v1275
    %v1291 = vpack.c.b16 %v1278, %v1277
    %v1292 = vpack.c.b16 %v1280, %v1279
    %v1293 = vpack.c.b16 %v1282, %v1281
    %v1294 = vpack.c.b16 %v1284, %v1283
    %v1295 = vpack.c.b16 %v1286, %v1285
    %v1296 = vpack.c.b16 %v1288, %v1287
    %1305 = vmatprep.subr.bf16.mxu0 0
    %1306 = vmatpush1.bf16.msra.mxu0 %v1289
    %1307 = vmatprep.subr.bf16.mxu0 0
    %1308 = vmatpush1.bf16.msra.mxu0 %v1290
    %1309 = vmatprep.subr.bf16.mxu0 0
    %1310 = vmatpush1.bf16.msra.mxu0 %v1291
    %1311 = vmatprep.subr.bf16.mxu0 0
    %1312 = vmatpush1.bf16.msra.mxu0 %v1292
    %1313 = vmatprep.subr.bf16.mxu0 0
    %1314 = vmatpush1.bf16.msra.mxu0 %v1293
    %1315 = vmatprep.subr.bf16.mxu0 0
    %1316 = vmatpush1.bf16.msra.mxu0 %v1294
    %1317 = vmatprep.subr.bf16.mxu0 0
    %1318 = vmatpush1.bf16.msra.mxu0 %v1295
    %1319 = vmatprep.subr.bf16.mxu0 0
    %1320 = vmatpush1.bf16.msra.mxu0 %v1296
    %1321 = vmatprep.subr.bf16.mxu0 0
    %1322 = vmatpush1.bf16.msra.mxu0 0
    %1323 = vmatprep.subr.bf16.mxu0 0
    %1324 = vmatpush1.bf16.msra.mxu0 0
    %1325 = vmatprep.subr.bf16.mxu0 0
    %1326 = vmatpush1.bf16.msra.mxu0 0
    %1327 = vmatprep.subr.bf16.mxu0 0
    %1328 = vmatpush1.bf16.msra.mxu0 0
    %1329 = vmatprep.subr.bf16.mxu0 0
    %1330 = vmatpush1.bf16.msra.mxu0 0
    %1331 = vmatprep.subr.bf16.mxu0 0
    %1332 = vmatpush1.bf16.msra.mxu0 0
    %1333 = vmatprep.subr.bf16.mxu0 0
    %1334 = vmatpush1.bf16.msra.mxu0 0
    %1335 = vmatprep.subr.bf16.mxu0 0
    %1336 = vmatpush1.bf16.msra.mxu0 0
    %1337 = vmatprep.mubr.bf16.mxu0 0
    %1338 = vmatmul.mubr.bf16.gmra.mrb[0].mxu0 %v1233
    %v1339 = vpop.f32.mrb[0].mxu0
    %v1340 = vadd.f32 %v1255, %v1339
    %v1341 = vpop.f32.mrb[0].mxu0
    %v1342 = vpop.f32.mrb[0].mxu0
    %v1343 = vadd.f32 %v1255, %v1342
    %v1344 = vpop.f32.mrb[0].mxu0
    %1345 = vdwg.mxu0
    %v1346 = vmax.f32 %v1340, 0.0
    %v1347 = vmax.f32 %v1343, 0.0
    %v1348 = vpack.c.bf16 %v1347, %v1346
    %v1349 = vld [vmem:[%s7] sm:$0xf]
    %v1350 = vld [vmem:[%s7 + $0x4] sm:$0xf]
    %v1351 = vld [vmem:[%s7 + $0x8] sm:$0xf]
    %v1352 = vld [vmem:[%s7 + $0xc] sm:$0xf]
    %v1353 = vld [vmem:[%s7 + $0x10] sm:$0xf]
    %v1354 = vld [vmem:[%s7 + $0x14] sm:$0xf]
    %v1355 = vld [vmem:[%s7 + $0x18] sm:$0xf]
    %v1356 = vld [vmem:[%s7 + $0x1c] sm:$0xf]
    %v1357 = vld [vmem:[%s7 + $0x20] sm:$0xf]
    %v1358 = vld [vmem:[%s7 + $0x24] sm:$0xf]
    %v1359 = vld [vmem:[%s7 + $0x28] sm:$0xf]
    %v1360 = vld [vmem:[%s7 + $0x2c] sm:$0xf]
    %v1361 = vld [vmem:[%s7 + $0x30] sm:$0xf]
    %v1362 = vld [vmem:[%s7 + $0x34] sm:$0xf]
    %v1363 = vld [vmem:[%s7 + $0x38] sm:$0xf]
    %v1364 = vld [vmem:[%s7 + $0x3c] sm:$0xf]
    %v1365 = vld [vmem:[%s8] sm:$0x1]
    %v1367 = vlaneseq
    %v1368 = vshrl.u32 %v1367, 7
    %v1369 = vsub.s32 0, %v1368
    %v1370 = vrot.slane %v1365, %v1369
    %v1388 = vunpack.c.l.b16 %v1349
    %v1389 = vunpack.c.l.b16 %v1350
    %v1390 = vunpack.c.l.b16 %v1351
    %v1391 = vunpack.c.l.b16 %v1352
    %v1392 = vunpack.c.l.b16 %v1353
    %v1393 = vunpack.c.l.b16 %v1354
    %v1394 = vunpack.c.l.b16 %v1355
    %v1395 = vunpack.c.l.b16 %v1356
    %v1396 = vunpack.c.l.b16 %v1357
    %v1397 = vunpack.c.l.b16 %v1358
    %v1398 = vunpack.c.l.b16 %v1359
    %v1399 = vunpack.c.l.b16 %v1360
    %v1400 = vunpack.c.l.b16 %v1361
    %v1401 = vunpack.c.l.b16 %v1362
    %v1402 = vunpack.c.l.b16 %v1363
    %v1403 = vunpack.c.l.b16 %v1364
    %v1404 = vpack.c.b16 %v1389, %v1388
    %v1405 = vpack.c.b16 %v1391, %v1390
    %v1406 = vpack.c.b16 %v1393, %v1392
    %v1407 = vpack.c.b16 %v1395, %v1394
    %v1408 = vpack.c.b16 %v1397, %v1396
    %v1409 = vpack.c.b16 %v1399, %v1398
    %v1410 = vpack.c.b16 %v1401, %v1400
    %v1411 = vpack.c.b16 %v1403, %v1402
    %1420 = vmatprep.subr.bf16.mxu0 0
    %1421 = vmatpush1.bf16.msra.mxu0 %v1404
    %1422 = vmatprep.subr.bf16.mxu0 0
    %1423 = vmatpush1.bf16.msra.mxu0 %v1405
    %1424 = vmatprep.subr.bf16.mxu0 0
    %1425 = vmatpush1.bf16.msra.mxu0 %v1406
    %1426 = vmatprep.subr.bf16.mxu0 0
    %1427 = vmatpush1.bf16.msra.mxu0 %v1407
    %1428 = vmatprep.subr.bf16.mxu0 0
    %1429 = vmatpush1.bf16.msra.mxu0 %v1408
    %1430 = vmatprep.subr.bf16.mxu0 0
    %1431 = vmatpush1.bf16.msra.mxu0 %v1409
    %1432 = vmatprep.subr.bf16.mxu0 0
    %1433 = vmatpush1.bf16.msra.mxu0 %v1410
    %1434 = vmatprep.subr.bf16.mxu0 0
    %1435 = vmatpush1.bf16.msra.mxu0 %v1411
    %1436 = vmatprep.subr.bf16.mxu0 0
    %1437 = vmatpush1.bf16.msra.mxu0 0
    %1438 = vmatprep.subr.bf16.mxu0 0
    %1439 = vmatpush1.bf16.msra.mxu0 0
    %1440 = vmatprep.subr.bf16.mxu0 0
    %1441 = vmatpush1.bf16.msra.mxu0 0
    %1442 = vmatprep.subr.bf16.mxu0 0
    %1443 = vmatpush1.bf16.msra.mxu0 0
    %1444 = vmatprep.subr.bf16.mxu0 0
    %1445 = vmatpush1.bf16.msra.mxu0 0
    %1446 = vmatprep.subr.bf16.mxu0 0
    %1447 = vmatpush1.bf16.msra.mxu0 0
    %1448 = vmatprep.subr.bf16.mxu0 0
    %1449 = vmatpush1.bf16.msra.mxu0 0
    %1450 = vmatprep.subr.bf16.mxu0 0
    %1451 = vmatpush1.bf16.msra.mxu0 0
    %1452 = vmatprep.mubr.bf16.mxu0 0
    %1453 = vmatmul.mubr.bf16.gmra.mrb[0].mxu0 %v1348
    %v1454 = vpop.f32.mrb[0].mxu0
    %v1455 = vadd.f32 %v1370, %v1454
    %v1456 = vpop.f32.mrb[0].mxu0
    %v1457 = vpop.f32.mrb[0].mxu0
    %v1458 = vadd.f32 %v1370, %v1457
    %v1459 = vpop.f32.mrb[0].mxu0
    %1460 = vdwg.mxu0
    %v1461 = vmax.f32 %v1455, 0.0
    %v1462 = vmax.f32 %v1458, 0.0
    %v1463 = vpack.c.bf16 %v1462, %v1461
    %v1464 = vld [vmem:[%s9] sm:$0xff]
    %v1465 = vld [vmem:[%s9 + $0x8] sm:$0xff]
    %v1466 = vld [vmem:[%s9 + $0x10] sm:$0xff]
    %v1467 = vld [vmem:[%s9 + $0x18] sm:$0xff]
    %v1468 = vld [vmem:[%s9 + $0x20] sm:$0xff]
    %v1469 = vld [vmem:[%s9 + $0x28] sm:$0xff]
    %v1470 = vld [vmem:[%s9 + $0x30] sm:$0xff]
    %v1471 = vld [vmem:[%s9 + $0x38] sm:$0xff]
    %v1472 = vld [vmem:[%s9 + $0x40] sm:$0xff]
    %v1473 = vld [vmem:[%s9 + $0x48] sm:$0xff]
    %v1474 = vld [vmem:[%s9 + $0x50] sm:$0xff]
    %v1475 = vld [vmem:[%s9 + $0x58] sm:$0xff]
    %v1476 = vld [vmem:[%s9 + $0x60] sm:$0xff]
    %v1477 = vld [vmem:[%s9 + $0x68] sm:$0xff]
    %v1478 = vld [vmem:[%s9 + $0x70] sm:$0xff]
    %v1479 = vld [vmem:[%s9 + $0x78] sm:$0xff]
    %v1480 = vld [vmem:[%s10] sm:$0x3]
    %v1482 = vlaneseq
    %v1483 = vshrl.u32 %v1482, 7
    %v1484 = vsub.s32 0, %v1483
    %v1485 = vrot.slane %v1480, %v1484
    %v1486 = vlaneseq
    %v1487 = vshrl.u32 %v1486, 7
    %v1488 = vsub.s32 1, %v1487
    %v1489 = vrot.slane %v1480, %v1488
    %v1508 = vunpack.c.l.b16 %v1464
    %v1509 = vunpack.c.h.b16 %v1464
    %v1510 = vunpack.c.l.b16 %v1465
    %v1511 = vunpack.c.h.b16 %v1465
    %v1512 = vunpack.c.l.b16 %v1466
    %v1513 = vunpack.c.h.b16 %v1466
    %v1514 = vunpack.c.l.b16 %v1467
    %v1515 = vunpack.c.h.b16 %v1467
    %v1516 = vunpack.c.l.b16 %v1468
    %v1517 = vunpack.c.h.b16 %v1468
    %v1518 = vunpack.c.l.b16 %v1469
    %v1519 = vunpack.c.h.b16 %v1469
    %v1520 = vunpack.c.l.b16 %v1470
    %v1521 = vunpack.c.h.b16 %v1470
    %v1522 = vunpack.c.l.b16 %v1471
    %v1523 = vunpack.c.h.b16 %v1471
    %v1524 = vunpack.c.l.b16 %v1472
    %v1525 = vunpack.c.h.b16 %v1472
    %v1526 = vunpack.c.l.b16 %v1473
    %v1527 = vunpack.c.h.b16 %v1473
    %v1528 = vunpack.c.l.b16 %v1474
    %v1529 = vunpack.c.h.b16 %v1474
    %v1530 = vunpack.c.l.b16 %v1475
    %v1531 = vunpack.c.h.b16 %v1475
    %v1532 = vunpack.c.l.b16 %v1476
    %v1533 = vunpack.c.h.b16 %v1476
    %v1534 = vunpack.c.l.b16 %v1477
    %v1535 = vunpack.c.h.b16 %v1477
    %v1536 = vunpack.c.l.b16 %v1478
    %v1537 = vunpack.c.h.b16 %v1478
    %v1538 = vunpack.c.l.b16 %v1479
    %v1539 = vunpack.c.h.b16 %v1479
    %v1540 = vpack.c.b16 %v1510, %v1508
    %v1541 = vpack.c.b16 %v1511, %v1509
    %v1542 = vpack.c.b16 %v1514, %v1512
    %v1543 = vpack.c.b16 %v1515, %v1513
    %v1544 = vpack.c.b16 %v1518, %v1516
    %v1545 = vpack.c.b16 %v1519, %v1517
    %v1546 = vpack.c.b16 %v1522, %v1520
    %v1547 = vpack.c.b16 %v1523, %v1521
    %v1548 = vpack.c.b16 %v1526, %v1524
    %v1549 = vpack.c.b16 %v1527, %v1525
    %v1550 = vpack.c.b16 %v1530, %v1528
    %v1551 = vpack.c.b16 %v1531, %v1529
    %v1552 = vpack.c.b16 %v1534, %v1532
    %v1553 = vpack.c.b16 %v1535, %v1533
    %v1554 = vpack.c.b16 %v1538, %v1536
    %v1555 = vpack.c.b16 %v1539, %v1537
    %1572 = vmatprep.subr.bf16.mxu0 %v1541
    %1573 = vmatpush1.bf16.msra.mxu0 %v1540
    %1574 = vmatprep.subr.bf16.mxu0 %v1543
    %1575 = vmatpush1.bf16.msra.mxu0 %v1542
    %1576 = vmatprep.subr.bf16.mxu0 %v1545
    %1577 = vmatpush1.bf16.msra.mxu0 %v1544
    %1578 = vmatprep.subr.bf16.mxu0 %v1547
    %1579 = vmatpush1.bf16.msra.mxu0 %v1546
    %1580 = vmatprep.subr.bf16.mxu0 %v1549
    %1581 = vmatpush1.bf16.msra.mxu0 %v1548
    %1582 = vmatprep.subr.bf16.mxu0 %v1551
    %1583 = vmatpush1.bf16.msra.mxu0 %v1550
    %1584 = vmatprep.subr.bf16.mxu0 %v1553
    %1585 = vmatpush1.bf16.msra.mxu0 %v1552
    %1586 = vmatprep.subr.bf16.mxu0 %v1555
    %1587 = vmatpush1.bf16.msra.mxu0 %v1554
    %1588 = vmatprep.subr.bf16.mxu0 0
    %1589 = vmatpush1.bf16.msra.mxu0 0
    %1590 = vmatprep.subr.bf16.mxu0 0
    %1591 = vmatpush1.bf16.msra.mxu0 0
    %1592 = vmatprep.subr.bf16.mxu0 0
    %1593 = vmatpush1.bf16.msra.mxu0 0
    %1594 = vmatprep.subr.bf16.mxu0 0
    %1595 = vmatpush1.bf16.msra.mxu0 0
    %1596 = vmatprep.subr.bf16.mxu0 0
    %1597 = vmatpush1.bf16.msra.mxu0 0
    %1598 = vmatprep.subr.bf16.mxu0 0
    %1599 = vmatpush1.bf16.msra.mxu0 0
    %1600 = vmatprep.subr.bf16.mxu0 0
    %1601 = vmatpush1.bf16.msra.mxu0 0
    %1602 = vmatprep.subr.bf16.mxu0 0
    %1603 = vmatpush1.bf16.msra.mxu0 0
    %1604 = vmatprep.mubr.bf16.mxu0 0
    %1605 = vmatmul.mubr.bf16.gmra.mrb[0].mxu0 %v1463
    %v1606 = vpop.f32.mrb[0].mxu0
    %v1607 = vadd.f32 %v1485, %v1606
    %v1608 = vpop.f32.mrb[0].mxu0
    %v1609 = vadd.f32 %v1489, %v1608
    %v1610 = vpop.f32.mrb[0].mxu0
    %v1611 = vadd.f32 %v1485, %v1610
    %v1612 = vpop.f32.mrb[0].mxu0
    %v1613 = vadd.f32 %v1489, %v1612
    %1614 = vdwg.mxu0
    %v1615 = vmax.f32 %v1607, 0.0
    %v1616 = vmax.f32 %v1609, 0.0
    %v1617 = vmax.f32 %v1611, 0.0
    %v1618 = vmax.f32 %v1613, 0.0
    %v1619 = vpack.c.bf16 %v1617, %v1615
    %v1620 = vpack.c.bf16 %v1618, %v1616
    %v1621 = vld [vmem:[#allocation4] sm:$0xff]
    %v1622 = vld [vmem:[#allocation4 + $0x8] sm:$0xff]
    %v1623 = vld [vmem:[#allocation4 + $0x10] sm:$0xff]
    %v1624 = vld [vmem:[#allocation4 + $0x18] sm:$0xff]
    %v1625 = vld [vmem:[#allocation4 + $0x20] sm:$0xff]
    %v1626 = vld [vmem:[#allocation4 + $0x28] sm:$0xff]
    %v1627 = vld [vmem:[#allocation4 + $0x30] sm:$0xff]
    %v1628 = vld [vmem:[#allocation4 + $0x38] sm:$0xff]
    %v1629 = vld [vmem:[#allocation4 + $0x40] sm:$0xff]
    %v1630 = vld [vmem:[#allocation4 + $0x48] sm:$0xff]
    %v1631 = vld [vmem:[#allocation4 + $0x50] sm:$0xff]
    %v1632 = vld [vmem:[#allocation4 + $0x58] sm:$0xff]
    %v1633 = vld [vmem:[#allocation4 + $0x60] sm:$0xff]
    %v1634 = vld [vmem:[#allocation4 + $0x68] sm:$0xff]
    %v1635 = vld [vmem:[#allocation4 + $0x70] sm:$0xff]
    %v1636 = vld [vmem:[#allocation4 + $0x78] sm:$0xff]
    %v1637 = vld [vmem:[#allocation4 + $0x80] sm:$0xff]
    %v1638 = vld [vmem:[#allocation4 + $0x88] sm:$0xff]
    %v1639 = vld [vmem:[#allocation4 + $0x90] sm:$0xff]
    %v1640 = vld [vmem:[#allocation4 + $0x98] sm:$0xff]
    %v1641 = vld [vmem:[#allocation4 + $0xa0] sm:$0xff]
    %v1642 = vld [vmem:[#allocation4 + $0xa8] sm:$0xff]
    %v1643 = vld [vmem:[#allocation4 + $0xb0] sm:$0xff]
    %v1644 = vld [vmem:[#allocation4 + $0xb8] sm:$0xff]
    %v1645 = vld [vmem:[#allocation4 + $0xc0] sm:$0xff]
    %v1646 = vld [vmem:[#allocation4 + $0xc8] sm:$0xff]
    %v1647 = vld [vmem:[#allocation4 + $0xd0] sm:$0xff]
    %v1648 = vld [vmem:[#allocation4 + $0xd8] sm:$0xff]
    %v1649 = vld [vmem:[#allocation4 + $0xe0] sm:$0xff]
    %v1650 = vld [vmem:[#allocation4 + $0xe8] sm:$0xff]
    %v1651 = vld [vmem:[#allocation4 + $0xf0] sm:$0xff]
    %v1652 = vld [vmem:[#allocation4 + $0xf8] sm:$0xff]
    %v1653 = vld [vmem:[#allocation4 + $0x100] sm:$0xff]
    %v1654 = vld [vmem:[#allocation4 + $0x108] sm:$0xff]
    %v1655 = vld [vmem:[#allocation4 + $0x110] sm:$0xff]
    %v1656 = vld [vmem:[#allocation4 + $0x118] sm:$0xff]
    %v1657 = vld [vmem:[#allocation4 + $0x120] sm:$0xff]
    %v1658 = vld [vmem:[#allocation4 + $0x128] sm:$0xff]
    %v1659 = vld [vmem:[#allocation4 + $0x130] sm:$0xff]
    %v1660 = vld [vmem:[#allocation4 + $0x138] sm:$0xff]
    %v1661 = vld [vmem:[#allocation4 + $0x140] sm:$0xff]
    %v1662 = vld [vmem:[#allocation4 + $0x148] sm:$0xff]
    %v1663 = vld [vmem:[#allocation4 + $0x150] sm:$0xff]
    %v1664 = vld [vmem:[#allocation4 + $0x158] sm:$0xff]
    %v1665 = vld [vmem:[#allocation4 + $0x160] sm:$0xff]
    %v1666 = vld [vmem:[#allocation4 + $0x168] sm:$0xff]
    %v1667 = vld [vmem:[#allocation4 + $0x170] sm:$0xff]
    %v1668 = vld [vmem:[#allocation4 + $0x178] sm:$0xff]
    %v1669 = vld [vmem:[#allocation4 + $0x180] sm:$0xff]
    %v1670 = vld [vmem:[#allocation4 + $0x188] sm:$0xff]
    %v1671 = vld [vmem:[#allocation4 + $0x190] sm:$0xff]
    %v1672 = vld [vmem:[#allocation4 + $0x198] sm:$0xff]
    %v1673 = vld [vmem:[#allocation4 + $0x1a0] sm:$0xff]
    %v1674 = vld [vmem:[#allocation4 + $0x1a8] sm:$0xff]
    %v1675 = vld [vmem:[#allocation4 + $0x1b0] sm:$0xff]
    %v1676 = vld [vmem:[#allocation4 + $0x1b8] sm:$0xff]
    %v1677 = vld [vmem:[#allocation4 + $0x1c0] sm:$0xff]
    %v1678 = vld [vmem:[#allocation4 + $0x1c8] sm:$0xff]
    %v1679 = vld [vmem:[#allocation4 + $0x1d0] sm:$0xff]
    %v1680 = vld [vmem:[#allocation4 + $0x1d8] sm:$0xff]
    %v1681 = vld [vmem:[#allocation4 + $0x1e0] sm:$0xff]
    %v1682 = vld [vmem:[#allocation4 + $0x1e8] sm:$0xff]
    %v1683 = vld [vmem:[#allocation4 + $0x1f0] sm:$0xff]
    %v1684 = vld [vmem:[#allocation4 + $0x1f8] sm:$0xff]
    %v1685 = vld [vmem:[#allocation4 + $0x200] sm:$0xff]
    %v1686 = vld [vmem:[#allocation4 + $0x208] sm:$0xff]
    %v1687 = vld [vmem:[#allocation4 + $0x210] sm:$0xff]
    %v1688 = vld [vmem:[#allocation4 + $0x218] sm:$0xff]
    %v1689 = vld [vmem:[#allocation4 + $0x220] sm:$0xff]
    %v1690 = vld [vmem:[#allocation4 + $0x228] sm:$0xff]
    %v1691 = vld [vmem:[#allocation4 + $0x230] sm:$0xff]
    %v1692 = vld [vmem:[#allocation4 + $0x238] sm:$0xff]
    %v1693 = vld [vmem:[#allocation4 + $0x240] sm:$0xff]
    %v1694 = vld [vmem:[#allocation4 + $0x248] sm:$0xff]
    %v1695 = vld [vmem:[#allocation4 + $0x250] sm:$0xff]
    %v1696 = vld [vmem:[#allocation4 + $0x258] sm:$0xff]
    %v1697 = vld [vmem:[#allocation4 + $0x260] sm:$0xff]
    %v1698 = vld [vmem:[#allocation4 + $0x268] sm:$0xff]
    %v1699 = vld [vmem:[#allocation4 + $0x270] sm:$0xff]
    %v1700 = vld [vmem:[#allocation4 + $0x278] sm:$0xff]
    %v1701 = vld [vmem:[#allocation4 + $0x280] sm:$0xff]
    %v1702 = vld [vmem:[#allocation4 + $0x288] sm:$0xff]
    %v1703 = vld [vmem:[#allocation4 + $0x290] sm:$0xff]
    %v1704 = vld [vmem:[#allocation4 + $0x298] sm:$0xff]
    %v1705 = vld [vmem:[#allocation4 + $0x2a0] sm:$0xff]
    %v1706 = vld [vmem:[#allocation4 + $0x2a8] sm:$0xff]
    %v1707 = vld [vmem:[#allocation4 + $0x2b0] sm:$0xff]
    %v1708 = vld [vmem:[#allocation4 + $0x2b8] sm:$0xff]
    %v1709 = vld [vmem:[#allocation4 + $0x2c0] sm:$0xff]
    %v1710 = vld [vmem:[#allocation4 + $0x2c8] sm:$0xff]
    %v1711 = vld [vmem:[#allocation4 + $0x2d0] sm:$0xff]
    %v1712 = vld [vmem:[#allocation4 + $0x2d8] sm:$0xff]
    %v1713 = vld [vmem:[#allocation4 + $0x2e0] sm:$0xff]
    %v1714 = vld [vmem:[#allocation4 + $0x2e8] sm:$0xff]
    %v1715 = vld [vmem:[#allocation4 + $0x2f0] sm:$0xff]
    %v1716 = vld [vmem:[#allocation4 + $0x2f8] sm:$0xff]
    %v1717 = vld [vmem:[#allocation4 + $0x300] sm:$0xff]
    %v1718 = vld [vmem:[#allocation4 + $0x308] sm:$0xff]
    %v1719 = vld [vmem:[#allocation4 + $0x310] sm:$0xff]
    %v1720 = vld [vmem:[#allocation4 + $0x318] sm:$0xff]
    %v1721 = vld [vmem:[#allocation4 + $0x320] sm:$0xff]
    %v1722 = vld [vmem:[#allocation4 + $0x328] sm:$0xff]
    %v1723 = vld [vmem:[#allocation4 + $0x330] sm:$0xff]
    %v1724 = vld [vmem:[#allocation4 + $0x338] sm:$0xff]
    %v1725 = vld [vmem:[#allocation4 + $0x340] sm:$0xff]
    %v1726 = vld [vmem:[#allocation4 + $0x348] sm:$0xff]
    %v1727 = vld [vmem:[#allocation4 + $0x350] sm:$0xff]
    %v1728 = vld [vmem:[#allocation4 + $0x358] sm:$0xff]
    %v1729 = vld [vmem:[#allocation4 + $0x360] sm:$0xff]
    %v1730 = vld [vmem:[#allocation4 + $0x368] sm:$0xff]
    %v1731 = vld [vmem:[#allocation4 + $0x370] sm:$0xff]
    %v1732 = vld [vmem:[#allocation4 + $0x378] sm:$0xff]
    %v1733 = vld [vmem:[#allocation4 + $0x380] sm:$0xff]
    %v1734 = vld [vmem:[#allocation4 + $0x388] sm:$0xff]
    %v1735 = vld [vmem:[#allocation4 + $0x390] sm:$0xff]
    %v1736 = vld [vmem:[#allocation4 + $0x398] sm:$0xff]
    %v1737 = vld [vmem:[#allocation4 + $0x3a0] sm:$0xff]
    %v1738 = vld [vmem:[#allocation4 + $0x3a8] sm:$0xff]
    %v1739 = vld [vmem:[#allocation4 + $0x3b0] sm:$0xff]
    %v1740 = vld [vmem:[#allocation4 + $0x3b8] sm:$0xff]
    %v1741 = vld [vmem:[#allocation4 + $0x3c0] sm:$0xff]
    %v1742 = vld [vmem:[#allocation4 + $0x3c8] sm:$0xff]
    %v1743 = vld [vmem:[#allocation4 + $0x3d0] sm:$0xff]
    %v1744 = vld [vmem:[#allocation4 + $0x3d8] sm:$0xff]
    %v1745 = vld [vmem:[#allocation4 + $0x3e0] sm:$0xff]
    %v1746 = vld [vmem:[#allocation4 + $0x3e8] sm:$0xff]
    %v1747 = vld [vmem:[#allocation4 + $0x3f0] sm:$0xff]
    %v1748 = vld [vmem:[#allocation4 + $0x3f8] sm:$0xff]
    %v1749 = vld [vmem:[%s12] sm:$0xff]
    %v1751 = vlaneseq
    %v1752 = vshrl.u32 %v1751, 7
    %v1753 = vsub.s32 0, %v1752
    %v1754 = vrot.slane %v1749, %v1753
    %v1755 = vlaneseq
    %v1756 = vshrl.u32 %v1755, 7
    %v1757 = vsub.s32 1, %v1756
    %v1758 = vrot.slane %v1749, %v1757
    %v1759 = vlaneseq
    %v1760 = vshrl.u32 %v1759, 7
    %v1761 = vsub.s32 2, %v1760
    %v1762 = vrot.slane %v1749, %v1761
    %v1763 = vlaneseq
    %v1764 = vshrl.u32 %v1763, 7
    %v1765 = vsub.s32 3, %v1764
    %v1766 = vrot.slane %v1749, %v1765
    %v1767 = vlaneseq
    %v1768 = vshrl.u32 %v1767, 7
    %v1769 = vsub.s32 4, %v1768
    %v1770 = vrot.slane %v1749, %v1769
    %v1771 = vlaneseq
    %v1772 = vshrl.u32 %v1771, 7
    %v1773 = vsub.s32 5, %v1772
    %v1774 = vrot.slane %v1749, %v1773
    %v1775 = vlaneseq
    %v1776 = vshrl.u32 %v1775, 7
    %v1777 = vsub.s32 6, %v1776
    %v1778 = vrot.slane %v1749, %v1777
    %v1779 = vlaneseq
    %v1780 = vshrl.u32 %v1779, 7
    %v1781 = vsub.s32 7, %v1780
    %v1782 = vrot.slane %v1749, %v1781
    %v1919 = vunpack.c.l.b16 %v1621
    %v1920 = vunpack.c.h.b16 %v1621
    %v1921 = vunpack.c.l.b16 %v1622
    %v1922 = vunpack.c.h.b16 %v1622
    %v1923 = vunpack.c.l.b16 %v1623
    %v1924 = vunpack.c.h.b16 %v1623
    %v1925 = vunpack.c.l.b16 %v1624
    %v1926 = vunpack.c.h.b16 %v1624
    %v1927 = vunpack.c.l.b16 %v1625
    %v1928 = vunpack.c.h.b16 %v1625
    %v1929 = vunpack.c.l.b16 %v1626
    %v1930 = vunpack.c.h.b16 %v1626
    %v1931 = vunpack.c.l.b16 %v1627
    %v1932 = vunpack.c.h.b16 %v1627
    %v1933 = vunpack.c.l.b16 %v1628
    %v1934 = vunpack.c.h.b16 %v1628
    %v1935 = vunpack.c.l.b16 %v1629
    %v1936 = vunpack.c.h.b16 %v1629
    %v1937 = vunpack.c.l.b16 %v1630
    %v1938 = vunpack.c.h.b16 %v1630
    %v1939 = vunpack.c.l.b16 %v1631
    %v1940 = vunpack.c.h.b16 %v1631
    %v1941 = vunpack.c.l.b16 %v1632
    %v1942 = vunpack.c.h.b16 %v1632
    %v1943 = vunpack.c.l.b16 %v1633
    %v1944 = vunpack.c.h.b16 %v1633
    %v1945 = vunpack.c.l.b16 %v1634
    %v1946 = vunpack.c.h.b16 %v1634
    %v1947 = vunpack.c.l.b16 %v1635
    %v1948 = vunpack.c.h.b16 %v1635
    %v1949 = vunpack.c.l.b16 %v1636
    %v1950 = vunpack.c.h.b16 %v1636
    %v1951 = vunpack.c.l.b16 %v1637
    %v1952 = vunpack.c.h.b16 %v1637
    %v1953 = vunpack.c.l.b16 %v1638
    %v1954 = vunpack.c.h.b16 %v1638
    %v1955 = vunpack.c.l.b16 %v1639
    %v1956 = vunpack.c.h.b16 %v1639
    %v1957 = vunpack.c.l.b16 %v1640
    %v1958 = vunpack.c.h.b16 %v1640
    %v1959 = vunpack.c.l.b16 %v1641
    %v1960 = vunpack.c.h.b16 %v1641
    %v1961 = vunpack.c.l.b16 %v1642
    %v1962 = vunpack.c.h.b16 %v1642
    %v1963 = vunpack.c.l.b16 %v1643
    %v1964 = vunpack.c.h.b16 %v1643
    %v1965 = vunpack.c.l.b16 %v1644
    %v1966 = vunpack.c.h.b16 %v1644
    %v1967 = vunpack.c.l.b16 %v1645
    %v1968 = vunpack.c.h.b16 %v1645
    %v1969 = vunpack.c.l.b16 %v1646
    %v1970 = vunpack.c.h.b16 %v1646
    %v1971 = vunpack.c.l.b16 %v1647
    %v1972 = vunpack.c.h.b16 %v1647
    %v1973 = vunpack.c.l.b16 %v1648
    %v1974 = vunpack.c.h.b16 %v1648
    %v1975 = vunpack.c.l.b16 %v1649
    %v1976 = vunpack.c.h.b16 %v1649
    %v1977 = vunpack.c.l.b16 %v1650
    %v1978 = vunpack.c.h.b16 %v1650
    %v1979 = vunpack.c.l.b16 %v1651
    %v1980 = vunpack.c.h.b16 %v1651
    %v1981 = vunpack.c.l.b16 %v1652
    %v1982 = vunpack.c.h.b16 %v1652
    %v1983 = vunpack.c.l.b16 %v1653
    %v1984 = vunpack.c.h.b16 %v1653
    %v1985 = vunpack.c.l.b16 %v1654
    %v1986 = vunpack.c.h.b16 %v1654
    %v1987 = vunpack.c.l.b16 %v1655
    %v1988 = vunpack.c.h.b16 %v1655
    %v1989 = vunpack.c.l.b16 %v1656
    %v1990 = vunpack.c.h.b16 %v1656
    %v1991 = vunpack.c.l.b16 %v1657
    %v1992 = vunpack.c.h.b16 %v1657
    %v1993 = vunpack.c.l.b16 %v1658
    %v1994 = vunpack.c.h.b16 %v1658
    %v1995 = vunpack.c.l.b16 %v1659
    %v1996 = vunpack.c.h.b16 %v1659
    %v1997 = vunpack.c.l.b16 %v1660
    %v1998 = vunpack.c.h.b16 %v1660
    %v1999 = vunpack.c.l.b16 %v1661
    %v2000 = vunpack.c.h.b16 %v1661
    %v2001 = vunpack.c.l.b16 %v1662
    %v2002 = vunpack.c.h.b16 %v1662
    %v2003 = vunpack.c.l.b16 %v1663
    %v2004 = vunpack.c.h.b16 %v1663
    %v2005 = vunpack.c.l.b16 %v1664
    %v2006 = vunpack.c.h.b16 %v1664
    %v2007 = vunpack.c.l.b16 %v1665
    %v2008 = vunpack.c.h.b16 %v1665
    %v2009 = vunpack.c.l.b16 %v1666
    %v2010 = vunpack.c.h.b16 %v1666
    %v2011 = vunpack.c.l.b16 %v1667
    %v2012 = vunpack.c.h.b16 %v1667
    %v2013 = vunpack.c.l.b16 %v1668
    %v2014 = vunpack.c.h.b16 %v1668
    %v2015 = vunpack.c.l.b16 %v1669
    %v2016 = vunpack.c.h.b16 %v1669
    %v2017 = vunpack.c.l.b16 %v1670
    %v2018 = vunpack.c.h.b16 %v1670
    %v2019 = vunpack.c.l.b16 %v1671
    %v2020 = vunpack.c.h.b16 %v1671
    %v2021 = vunpack.c.l.b16 %v1672
    %v2022 = vunpack.c.h.b16 %v1672
    %v2023 = vunpack.c.l.b16 %v1673
    %v2024 = vunpack.c.h.b16 %v1673
    %v2025 = vunpack.c.l.b16 %v1674
    %v2026 = vunpack.c.h.b16 %v1674
    %v2027 = vunpack.c.l.b16 %v1675
    %v2028 = vunpack.c.h.b16 %v1675
    %v2029 = vunpack.c.l.b16 %v1676
    %v2030 = vunpack.c.h.b16 %v1676
    %v2031 = vunpack.c.l.b16 %v1677
    %v2032 = vunpack.c.h.b16 %v1677
    %v2033 = vunpack.c.l.b16 %v1678
    %v2034 = vunpack.c.h.b16 %v1678
    %v2035 = vunpack.c.l.b16 %v1679
    %v2036 = vunpack.c.h.b16 %v1679
    %v2037 = vunpack.c.l.b16 %v1680
    %v2038 = vunpack.c.h.b16 %v1680
    %v2039 = vunpack.c.l.b16 %v1681
    %v2040 = vunpack.c.h.b16 %v1681
    %v2041 = vunpack.c.l.b16 %v1682
    %v2042 = vunpack.c.h.b16 %v1682
    %v2043 = vunpack.c.l.b16 %v1683
    %v2044 = vunpack.c.h.b16 %v1683
    %v2045 = vunpack.c.l.b16 %v1684
    %v2046 = vunpack.c.h.b16 %v1684
    %v2047 = vunpack.c.l.b16 %v1685
    %v2048 = vunpack.c.h.b16 %v1685
    %v2049 = vunpack.c.l.b16 %v1686
    %v2050 = vunpack.c.h.b16 %v1686
    %v2051 = vunpack.c.l.b16 %v1687
    %v2052 = vunpack.c.h.b16 %v1687
    %v2053 = vunpack.c.l.b16 %v1688
    %v2054 = vunpack.c.h.b16 %v1688
    %v2055 = vunpack.c.l.b16 %v1689
    %v2056 = vunpack.c.h.b16 %v1689
    %v2057 = vunpack.c.l.b16 %v1690
    %v2058 = vunpack.c.h.b16 %v1690
    %v2059 = vunpack.c.l.b16 %v1691
    %v2060 = vunpack.c.h.b16 %v1691
    %v2061 = vunpack.c.l.b16 %v1692
    %v2062 = vunpack.c.h.b16 %v1692
    %v2063 = vunpack.c.l.b16 %v1693
    %v2064 = vunpack.c.h.b16 %v1693
    %v2065 = vunpack.c.l.b16 %v1694
    %v2066 = vunpack.c.h.b16 %v1694
    %v2067 = vunpack.c.l.b16 %v1695
    %v2068 = vunpack.c.h.b16 %v1695
    %v2069 = vunpack.c.l.b16 %v1696
    %v2070 = vunpack.c.h.b16 %v1696
    %v2071 = vunpack.c.l.b16 %v1697
    %v2072 = vunpack.c.h.b16 %v1697
    %v2073 = vunpack.c.l.b16 %v1698
    %v2074 = vunpack.c.h.b16 %v1698
    %v2075 = vunpack.c.l.b16 %v1699
    %v2076 = vunpack.c.h.b16 %v1699
    %v2077 = vunpack.c.l.b16 %v1700
    %v2078 = vunpack.c.h.b16 %v1700
    %v2079 = vunpack.c.l.b16 %v1701
    %v2080 = vunpack.c.h.b16 %v1701
    %v2081 = vunpack.c.l.b16 %v1702
    %v2082 = vunpack.c.h.b16 %v1702
    %v2083 = vunpack.c.l.b16 %v1703
    %v2084 = vunpack.c.h.b16 %v1703
    %v2085 = vunpack.c.l.b16 %v1704
    %v2086 = vunpack.c.h.b16 %v1704
    %v2087 = vunpack.c.l.b16 %v1705
    %v2088 = vunpack.c.h.b16 %v1705
    %v2089 = vunpack.c.l.b16 %v1706
    %v2090 = vunpack.c.h.b16 %v1706
    %v2091 = vunpack.c.l.b16 %v1707
    %v2092 = vunpack.c.h.b16 %v1707
    %v2093 = vunpack.c.l.b16 %v1708
    %v2094 = vunpack.c.h.b16 %v1708
    %v2095 = vunpack.c.l.b16 %v1709
    %v2096 = vunpack.c.h.b16 %v1709
    %v2097 = vunpack.c.l.b16 %v1710
    %v2098 = vunpack.c.h.b16 %v1710
    %v2099 = vunpack.c.l.b16 %v1711
    %v2100 = vunpack.c.h.b16 %v1711
    %v2101 = vunpack.c.l.b16 %v1712
    %v2102 = vunpack.c.h.b16 %v1712
    %v2103 = vunpack.c.l.b16 %v1713
    %v2104 = vunpack.c.h.b16 %v1713
    %v2105 = vunpack.c.l.b16 %v1714
    %v2106 = vunpack.c.h.b16 %v1714
    %v2107 = vunpack.c.l.b16 %v1715
    %v2108 = vunpack.c.h.b16 %v1715
    %v2109 = vunpack.c.l.b16 %v1716
    %v2110 = vunpack.c.h.b16 %v1716
    %v2111 = vunpack.c.l.b16 %v1717
    %v2112 = vunpack.c.h.b16 %v1717
    %v2113 = vunpack.c.l.b16 %v1718
    %v2114 = vunpack.c.h.b16 %v1718
    %v2115 = vunpack.c.l.b16 %v1719
    %v2116 = vunpack.c.h.b16 %v1719
    %v2117 = vunpack.c.l.b16 %v1720
    %v2118 = vunpack.c.h.b16 %v1720
    %v2119 = vunpack.c.l.b16 %v1721
    %v2120 = vunpack.c.h.b16 %v1721
    %v2121 = vunpack.c.l.b16 %v1722
    %v2122 = vunpack.c.h.b16 %v1722
    %v2123 = vunpack.c.l.b16 %v1723
    %v2124 = vunpack.c.h.b16 %v1723
    %v2125 = vunpack.c.l.b16 %v1724
    %v2126 = vunpack.c.h.b16 %v1724
    %v2127 = vunpack.c.l.b16 %v1725
    %v2128 = vunpack.c.h.b16 %v1725
    %v2129 = vunpack.c.l.b16 %v1726
    %v2130 = vunpack.c.h.b16 %v1726
    %v2131 = vunpack.c.l.b16 %v1727
    %v2132 = vunpack.c.h.b16 %v1727
    %v2133 = vunpack.c.l.b16 %v1728
    %v2134 = vunpack.c.h.b16 %v1728
    %v2135 = vunpack.c.l.b16 %v1729
    %v2136 = vunpack.c.h.b16 %v1729
    %v2137 = vunpack.c.l.b16 %v1730
    %v2138 = vunpack.c.h.b16 %v1730
    %v2139 = vunpack.c.l.b16 %v1731
    %v2140 = vunpack.c.h.b16 %v1731
    %v2141 = vunpack.c.l.b16 %v1732
    %v2142 = vunpack.c.h.b16 %v1732
    %v2143 = vunpack.c.l.b16 %v1733
    %v2144 = vunpack.c.h.b16 %v1733
    %v2145 = vunpack.c.l.b16 %v1734
    %v2146 = vunpack.c.h.b16 %v1734
    %v2147 = vunpack.c.l.b16 %v1735
    %v2148 = vunpack.c.h.b16 %v1735
    %v2149 = vunpack.c.l.b16 %v1736
    %v2150 = vunpack.c.h.b16 %v1736
    %v2151 = vunpack.c.l.b16 %v1737
    %v2152 = vunpack.c.h.b16 %v1737
    %v2153 = vunpack.c.l.b16 %v1738
    %v2154 = vunpack.c.h.b16 %v1738
    %v2155 = vunpack.c.l.b16 %v1739
    %v2156 = vunpack.c.h.b16 %v1739
    %v2157 = vunpack.c.l.b16 %v1740
    %v2158 = vunpack.c.h.b16 %v1740
    %v2159 = vunpack.c.l.b16 %v1741
    %v2160 = vunpack.c.h.b16 %v1741
    %v2161 = vunpack.c.l.b16 %v1742
    %v2162 = vunpack.c.h.b16 %v1742
    %v2163 = vunpack.c.l.b16 %v1743
    %v2164 = vunpack.c.h.b16 %v1743
    %v2165 = vunpack.c.l.b16 %v1744
    %v2166 = vunpack.c.h.b16 %v1744
    %v2167 = vunpack.c.l.b16 %v1745
    %v2168 = vunpack.c.h.b16 %v1745
    %v2169 = vunpack.c.l.b16 %v1746
    %v2170 = vunpack.c.h.b16 %v1746
    %v2171 = vunpack.c.l.b16 %v1747
    %v2172 = vunpack.c.h.b16 %v1747
    %v2173 = vunpack.c.l.b16 %v1748
    %v2174 = vunpack.c.h.b16 %v1748
    %v2175 = vpack.c.b16 %v1927, %v1919
    %v2176 = vpack.c.b16 %v1928, %v1920
    %v2177 = vpack.c.b16 %v1929, %v1921
    %v2178 = vpack.c.b16 %v1930, %v1922
    %v2179 = vpack.c.b16 %v1931, %v1923
    %v2180 = vpack.c.b16 %v1932, %v1924
    %v2181 = vpack.c.b16 %v1933, %v1925
    %v2182 = vpack.c.b16 %v1934, %v1926
    %v2183 = vpack.c.b16 %v1943, %v1935
    %v2184 = vpack.c.b16 %v1944, %v1936
    %v2185 = vpack.c.b16 %v1945, %v1937
    %v2186 = vpack.c.b16 %v1946, %v1938
    %v2187 = vpack.c.b16 %v1947, %v1939
    %v2188 = vpack.c.b16 %v1948, %v1940
    %v2189 = vpack.c.b16 %v1949, %v1941
    %v2190 = vpack.c.b16 %v1950, %v1942
    %v2191 = vpack.c.b16 %v1959, %v1951
    %v2192 = vpack.c.b16 %v1960, %v1952
    %v2193 = vpack.c.b16 %v1961, %v1953
    %v2194 = vpack.c.b16 %v1962, %v1954
    %v2195 = vpack.c.b16 %v1963, %v1955
    %v2196 = vpack.c.b16 %v1964, %v1956
    %v2197 = vpack.c.b16 %v1965, %v1957
    %v2198 = vpack.c.b16 %v1966, %v1958
    %v2199 = vpack.c.b16 %v1975, %v1967
    %v2200 = vpack.c.b16 %v1976, %v1968
    %v2201 = vpack.c.b16 %v1977, %v1969
    %v2202 = vpack.c.b16 %v1978, %v1970
    %v2203 = vpack.c.b16 %v1979, %v1971
    %v2204 = vpack.c.b16 %v1980, %v1972
    %v2205 = vpack.c.b16 %v1981, %v1973
    %v2206 = vpack.c.b16 %v1982, %v1974
    %v2207 = vpack.c.b16 %v1991, %v1983
    %v2208 = vpack.c.b16 %v1992, %v1984
    %v2209 = vpack.c.b16 %v1993, %v1985
    %v2210 = vpack.c.b16 %v1994, %v1986
    %v2211 = vpack.c.b16 %v1995, %v1987
    %v2212 = vpack.c.b16 %v1996, %v1988
    %v2213 = vpack.c.b16 %v1997, %v1989
    %v2214 = vpack.c.b16 %v1998, %v1990
    %v2215 = vpack.c.b16 %v2007, %v1999
    %v2216 = vpack.c.b16 %v2008, %v2000
    %v2217 = vpack.c.b16 %v2009, %v2001
    %v2218 = vpack.c.b16 %v2010, %v2002
    %v2219 = vpack.c.b16 %v2011, %v2003
    %v2220 = vpack.c.b16 %v2012, %v2004
    %v2221 = vpack.c.b16 %v2013, %v2005
    %v2222 = vpack.c.b16 %v2014, %v2006
    %v2223 = vpack.c.b16 %v2023, %v2015
    %v2224 = vpack.c.b16 %v2024, %v2016
    %v2225 = vpack.c.b16 %v2025, %v2017
    %v2226 = vpack.c.b16 %v2026, %v2018
    %v2227 = vpack.c.b16 %v2027, %v2019
    %v2228 = vpack.c.b16 %v2028, %v2020
    %v2229 = vpack.c.b16 %v2029, %v2021
    %v2230 = vpack.c.b16 %v2030, %v2022
    %v2231 = vpack.c.b16 %v2039, %v2031
    %v2232 = vpack.c.b16 %v2040, %v2032
    %v2233 = vpack.c.b16 %v2041, %v2033
    %v2234 = vpack.c.b16 %v2042, %v2034
    %v2235 = vpack.c.b16 %v2043, %v2035
    %v2236 = vpack.c.b16 %v2044, %v2036
    %v2237 = vpack.c.b16 %v2045, %v2037
    %v2238 = vpack.c.b16 %v2046, %v2038
    %v2239 = vpack.c.b16 %v2055, %v2047
    %v2240 = vpack.c.b16 %v2056, %v2048
    %v2241 = vpack.c.b16 %v2057, %v2049
    %v2242 = vpack.c.b16 %v2058, %v2050
    %v2243 = vpack.c.b16 %v2059, %v2051
    %v2244 = vpack.c.b16 %v2060, %v2052
    %v2245 = vpack.c.b16 %v2061, %v2053
    %v2246 = vpack.c.b16 %v2062, %v2054
    %v2247 = vpack.c.b16 %v2071, %v2063
    %v2248 = vpack.c.b16 %v2072, %v2064
    %v2249 = vpack.c.b16 %v2073, %v2065
    %v2250 = vpack.c.b16 %v2074, %v2066
    %v2251 = vpack.c.b16 %v2075, %v2067
    %v2252 = vpack.c.b16 %v2076, %v2068
    %v2253 = vpack.c.b16 %v2077, %v2069
    %v2254 = vpack.c.b16 %v2078, %v2070
    %v2255 = vpack.c.b16 %v2087, %v2079
    %v2256 = vpack.c.b16 %v2088, %v2080
    %v2257 = vpack.c.b16 %v2089, %v2081
    %v2258 = vpack.c.b16 %v2090, %v2082
    %v2259 = vpack.c.b16 %v2091, %v2083
    %v2260 = vpack.c.b16 %v2092, %v2084
    %v2261 = vpack.c.b16 %v2093, %v2085
    %v2262 = vpack.c.b16 %v2094, %v2086
    %v2263 = vpack.c.b16 %v2103, %v2095
    %v2264 = vpack.c.b16 %v2104, %v2096
    %v2265 = vpack.c.b16 %v2105, %v2097
    %v2266 = vpack.c.b16 %v2106, %v2098
    %v2267 = vpack.c.b16 %v2107, %v2099
    %v2268 = vpack.c.b16 %v2108, %v2100
    %v2269 = vpack.c.b16 %v2109, %v2101
    %v2270 = vpack.c.b16 %v2110, %v2102
    %v2271 = vpack.c.b16 %v2119, %v2111
    %v2272 = vpack.c.b16 %v2120, %v2112
    %v2273 = vpack.c.b16 %v2121, %v2113
    %v2274 = vpack.c.b16 %v2122, %v2114
    %v2275 = vpack.c.b16 %v2123, %v2115
    %v2276 = vpack.c.b16 %v2124, %v2116
    %v2277 = vpack.c.b16 %v2125, %v2117
    %v2278 = vpack.c.b16 %v2126, %v2118
    %v2279 = vpack.c.b16 %v2135, %v2127
    %v2280 = vpack.c.b16 %v2136, %v2128
    %v2281 = vpack.c.b16 %v2137, %v2129
    %v2282 = vpack.c.b16 %v2138, %v2130
    %v2283 = vpack.c.b16 %v2139, %v2131
    %v2284 = vpack.c.b16 %v2140, %v2132
    %v2285 = vpack.c.b16 %v2141, %v2133
    %v2286 = vpack.c.b16 %v2142, %v2134
    %v2287 = vpack.c.b16 %v2151, %v2143
    %v2288 = vpack.c.b16 %v2152, %v2144
    %v2289 = vpack.c.b16 %v2153, %v2145
    %v2290 = vpack.c.b16 %v2154, %v2146
    %v2291 = vpack.c.b16 %v2155, %v2147
    %v2292 = vpack.c.b16 %v2156, %v2148
    %v2293 = vpack.c.b16 %v2157, %v2149
    %v2294 = vpack.c.b16 %v2158, %v2150
    %v2295 = vpack.c.b16 %v2167, %v2159
    %v2296 = vpack.c.b16 %v2168, %v2160
    %v2297 = vpack.c.b16 %v2169, %v2161
    %v2298 = vpack.c.b16 %v2170, %v2162
    %v2299 = vpack.c.b16 %v2171, %v2163
    %v2300 = vpack.c.b16 %v2172, %v2164
    %v2301 = vpack.c.b16 %v2173, %v2165
    %v2302 = vpack.c.b16 %v2174, %v2166
    %2431 = vmatprep.subr.bf16.mxu0 %v2176
    %2432 = vmatpush1.bf16.msra.mxu0 %v2175
    %2433 = vmatprep.subr.bf16.mxu0 %v2184
    %2434 = vmatpush1.bf16.msra.mxu0 %v2183
    %2435 = vmatprep.subr.bf16.mxu0 %v2192
    %2436 = vmatpush1.bf16.msra.mxu0 %v2191
    %2437 = vmatprep.subr.bf16.mxu0 %v2200
    %2438 = vmatpush1.bf16.msra.mxu0 %v2199
    %2439 = vmatprep.subr.bf16.mxu0 %v2208
    %2440 = vmatpush1.bf16.msra.mxu0 %v2207
    %2441 = vmatprep.subr.bf16.mxu0 %v2216
    %2442 = vmatpush1.bf16.msra.mxu0 %v2215
    %2443 = vmatprep.subr.bf16.mxu0 %v2224
    %2444 = vmatpush1.bf16.msra.mxu0 %v2223
    %2445 = vmatprep.subr.bf16.mxu0 %v2232
    %2446 = vmatpush1.bf16.msra.mxu0 %v2231
    %2447 = vmatprep.subr.bf16.mxu0 %v2240
    %2448 = vmatpush1.bf16.msra.mxu0 %v2239
    %2449 = vmatprep.subr.bf16.mxu0 %v2248
    %2450 = vmatpush1.bf16.msra.mxu0 %v2247
    %2451 = vmatprep.subr.bf16.mxu0 %v2256
    %2452 = vmatpush1.bf16.msra.mxu0 %v2255
    %2453 = vmatprep.subr.bf16.mxu0 %v2264
    %2454 = vmatpush1.bf16.msra.mxu0 %v2263
    %2455 = vmatprep.subr.bf16.mxu0 %v2272
    %2456 = vmatpush1.bf16.msra.mxu0 %v2271
    %2457 = vmatprep.subr.bf16.mxu0 %v2280
    %2458 = vmatpush1.bf16.msra.mxu0 %v2279
    %2459 = vmatprep.subr.bf16.mxu0 %v2288
    %2460 = vmatpush1.bf16.msra.mxu0 %v2287
    %2461 = vmatprep.subr.bf16.mxu0 %v2296
    %2462 = vmatpush1.bf16.msra.mxu0 %v2295
    %2463 = vmatprep.mubr.bf16.mxu0 %v1620
    %2464 = vmatmul.mubr.bf16.gmra.mrb[0].mxu0 %v1619
    %v2465 = vpop.f32.mrb[0].mxu0
    %v2466 = vadd.f32 %v1754, %v2465
    %v2467 = vpop.f32.mrb[0].mxu0
    %v2468 = vadd.f32 %v1758, %v2467
    %v2469 = vpop.f32.mrb[0].mxu0
    %v2470 = vadd.f32 %v1754, %v2469
    %v2471 = vpop.f32.mrb[0].mxu0
    %v2472 = vadd.f32 %v1758, %v2471
    %2473 = vdwg.mxu0
    %2474 = vmatprep.subr.bf16.mxu0 %v2178
    %2475 = vmatpush1.bf16.msra.mxu0 %v2177
    %2476 = vmatprep.subr.bf16.mxu0 %v2186
    %2477 = vmatpush1.bf16.msra.mxu0 %v2185
    %2478 = vmatprep.subr.bf16.mxu0 %v2194
    %2479 = vmatpush1.bf16.msra.mxu0 %v2193
    %2480 = vmatprep.subr.bf16.mxu0 %v2202
    %2481 = vmatpush1.bf16.msra.mxu0 %v2201
    %2482 = vmatprep.subr.bf16.mxu0 %v2210
    %2483 = vmatpush1.bf16.msra.mxu0 %v2209
    %2484 = vmatprep.subr.bf16.mxu0 %v2218
    %2485 = vmatpush1.bf16.msra.mxu0 %v2217
    %2486 = vmatprep.subr.bf16.mxu0 %v2226
    %2487 = vmatpush1.bf16.msra.mxu0 %v2225
    %2488 = vmatprep.subr.bf16.mxu0 %v2234
    %2489 = vmatpush1.bf16.msra.mxu0 %v2233
    %2490 = vmatprep.subr.bf16.mxu0 %v2242
    %2491 = vmatpush1.bf16.msra.mxu0 %v2241
    %2492 = vmatprep.subr.bf16.mxu0 %v2250
    %2493 = vmatpush1.bf16.msra.mxu0 %v2249
    %2494 = vmatprep.subr.bf16.mxu0 %v2258
    %2495 = vmatpush1.bf16.msra.mxu0 %v2257
    %2496 = vmatprep.subr.bf16.mxu0 %v2266
    %2497 = vmatpush1.bf16.msra.mxu0 %v2265
    %2498 = vmatprep.subr.bf16.mxu0 %v2274
    %2499 = vmatpush1.bf16.msra.mxu0 %v2273
    %2500 = vmatprep.subr.bf16.mxu0 %v2282
    %2501 = vmatpush1.bf16.msra.mxu0 %v2281
    %2502 = vmatprep.subr.bf16.mxu0 %v2290
    %2503 = vmatpush1.bf16.msra.mxu0 %v2289
    %2504 = vmatprep.subr.bf16.mxu0 %v2298
    %2505 = vmatpush1.bf16.msra.mxu0 %v2297
    %2506 = vmatprep.mubr.bf16.mxu0 %v1620
    %2507 = vmatmul.mubr.bf16.gmra.mrb[0].mxu0 %v1619
    %v2508 = vpop.f32.mrb[0].mxu0
    %v2509 = vadd.f32 %v1762, %v2508
    %v2510 = vpop.f32.mrb[0].mxu0
    %v2511 = vadd.f32 %v1766, %v2510
    %v2512 = vpop.f32.mrb[0].mxu0
    %v2513 = vadd.f32 %v1762, %v2512
    %v2514 = vpop.f32.mrb[0].mxu0
    %v2515 = vadd.f32 %v1766, %v2514
    %2516 = vdwg.mxu0
    %2517 = vmatprep.subr.bf16.mxu0 %v2180
    %2518 = vmatpush1.bf16.msra.mxu0 %v2179
    %2519 = vmatprep.subr.bf16.mxu0 %v2188
    %2520 = vmatpush1.bf16.msra.mxu0 %v2187
    %2521 = vmatprep.subr.bf16.mxu0 %v2196
    %2522 = vmatpush1.bf16.msra.mxu0 %v2195
    %2523 = vmatprep.subr.bf16.mxu0 %v2204
    %2524 = vmatpush1.bf16.msra.mxu0 %v2203
    %2525 = vmatprep.subr.bf16.mxu0 %v2212
    %2526 = vmatpush1.bf16.msra.mxu0 %v2211
    %2527 = vmatprep.subr.bf16.mxu0 %v2220
    %2528 = vmatpush1.bf16.msra.mxu0 %v2219
    %2529 = vmatprep.subr.bf16.mxu0 %v2228
    %2530 = vmatpush1.bf16.msra.mxu0 %v2227
    %2531 = vmatprep.subr.bf16.mxu0 %v2236
    %2532 = vmatpush1.bf16.msra.mxu0 %v2235
    %2533 = vmatprep.subr.bf16.mxu0 %v2244
    %2534 = vmatpush1.bf16.msra.mxu0 %v2243
    %2535 = vmatprep.subr.bf16.mxu0 %v2252
    %2536 = vmatpush1.bf16.msra.mxu0 %v2251
    %2537 = vmatprep.subr.bf16.mxu0 %v2260
    %2538 = vmatpush1.bf16.msra.mxu0 %v2259
    %2539 = vmatprep.subr.bf16.mxu0 %v2268
    %2540 = vmatpush1.bf16.msra.mxu0 %v2267
    %2541 = vmatprep.subr.bf16.mxu0 %v2276
    %2542 = vmatpush1.bf16.msra.mxu0 %v2275
    %2543 = vmatprep.subr.bf16.mxu0 %v2284
    %2544 = vmatpush1.bf16.msra.mxu0 %v2283
    %2545 = vmatprep.subr.bf16.mxu0 %v2292
    %2546 = vmatpush1.bf16.msra.mxu0 %v2291
    %2547 = vmatprep.subr.bf16.mxu0 %v2300
    %2548 = vmatpush1.bf16.msra.mxu0 %v2299
    %2549 = vmatprep.mubr.bf16.mxu0 %v1620
    %2550 = vmatmul.mubr.bf16.gmra.mrb[0].mxu0 %v1619
    %v2551 = vpop.f32.mrb[0].mxu0
    %v2552 = vadd.f32 %v1770, %v2551
    %v2553 = vpop.f32.mrb[0].mxu0
    %v2554 = vadd.f32 %v1774, %v2553
    %v2555 = vpop.f32.mrb[0].mxu0
    %v2556 = vadd.f32 %v1770, %v2555
    %v2557 = vpop.f32.mrb[0].mxu0
    %v2558 = vadd.f32 %v1774, %v2557
    %2559 = vdwg.mxu0
    %2560 = vmatprep.subr.bf16.mxu0 %v2182
    %2561 = vmatpush1.bf16.msra.mxu0 %v2181
    %2562 = vmatprep.subr.bf16.mxu0 %v2190
    %2563 = vmatpush1.bf16.msra.mxu0 %v2189
    %2564 = vmatprep.subr.bf16.mxu0 %v2198
    %2565 = vmatpush1.bf16.msra.mxu0 %v2197
    %2566 = vmatprep.subr.bf16.mxu0 %v2206
    %2567 = vmatpush1.bf16.msra.mxu0 %v2205
    %2568 = vmatprep.subr.bf16.mxu0 %v2214
    %2569 = vmatpush1.bf16.msra.mxu0 %v2213
    %2570 = vmatprep.subr.bf16.mxu0 %v2222
    %2571 = vmatpush1.bf16.msra.mxu0 %v2221
    %2572 = vmatprep.subr.bf16.mxu0 %v2230
    %2573 = vmatpush1.bf16.msra.mxu0 %v2229
    %2574 = vmatprep.subr.bf16.mxu0 %v2238
    %2575 = vmatpush1.bf16.msra.mxu0 %v2237
    %2576 = vmatprep.subr.bf16.mxu0 %v2246
    %2577 = vmatpush1.bf16.msra.mxu0 %v2245
    %2578 = vmatprep.subr.bf16.mxu0 %v2254
    %2579 = vmatpush1.bf16.msra.mxu0 %v2253
    %2580 = vmatprep.subr.bf16.mxu0 %v2262
    %2581 = vmatpush1.bf16.msra.mxu0 %v2261
    %2582 = vmatprep.subr.bf16.mxu0 %v2270
    %2583 = vmatpush1.bf16.msra.mxu0 %v2269
    %2584 = vmatprep.subr.bf16.mxu0 %v2278
    %2585 = vmatpush1.bf16.msra.mxu0 %v2277
    %2586 = vmatprep.subr.bf16.mxu0 %v2286
    %2587 = vmatpush1.bf16.msra.mxu0 %v2285
    %2588 = vmatprep.subr.bf16.mxu0 %v2294
    %2589 = vmatpush1.bf16.msra.mxu0 %v2293
    %2590 = vmatprep.subr.bf16.mxu0 %v2302
    %2591 = vmatpush1.bf16.msra.mxu0 %v2301
    %2592 = vmatprep.mubr.bf16.mxu0 %v1620
    %2593 = vmatmul.mubr.bf16.gmra.mrb[0].mxu0 %v1619
    %v2594 = vpop.f32.mrb[0].mxu0
    %v2595 = vadd.f32 %v1778, %v2594
    %v2596 = vpop.f32.mrb[0].mxu0
    %v2597 = vadd.f32 %v1782, %v2596
    %v2598 = vpop.f32.mrb[0].mxu0
    %v2599 = vadd.f32 %v1778, %v2598
    %v2600 = vpop.f32.mrb[0].mxu0
    %v2601 = vadd.f32 %v1782, %v2600
    %2602 = vdwg.mxu0
    %v2603 = vsub.f32 0.0, %v2466
    %v2604 = vsub.f32 0.0, %v2468
    %v2605 = vsub.f32 0.0, %v2509
    %v2606 = vsub.f32 0.0, %v2511
    %v2607 = vsub.f32 0.0, %v2552
    %v2608 = vsub.f32 0.0, %v2554
    %v2609 = vsub.f32 0.0, %v2595
    %v2610 = vsub.f32 0.0, %v2597
    %v2611 = vsub.f32 0.0, %v2470
    %v2612 = vsub.f32 0.0, %v2472
    %v2613 = vsub.f32 0.0, %v2513
    %v2614 = vsub.f32 0.0, %v2515
    %v2615 = vsub.f32 0.0, %v2556
    %v2616 = vsub.f32 0.0, %v2558
    %v2617 = vsub.f32 0.0, %v2599
    %v2618 = vsub.f32 0.0, %v2601
    %v2619 = vmul.f32 %v2603, 1.442695
    %v2620 = vpow.pop %v2619
    %v2621 = vmul.f32 %v2604, 1.442695
    %v2622 = vpow.pop %v2621
    %v2623 = vmul.f32 %v2605, 1.442695
    %v2624 = vpow.pop %v2623
    %v2625 = vmul.f32 %v2606, 1.442695
    %v2626 = vpow.pop %v2625
    %v2627 = vmul.f32 %v2607, 1.442695
    %v2628 = vpow.pop %v2627
    %v2629 = vmul.f32 %v2608, 1.442695
    %v2630 = vpow.pop %v2629
    %v2631 = vmul.f32 %v2609, 1.442695
    %v2632 = vpow.pop %v2631
    %v2633 = vmul.f32 %v2610, 1.442695
    %v2634 = vpow.pop %v2633
    %v2635 = vmul.f32 %v2611, 1.442695
    %v2636 = vpow.pop %v2635
    %v2637 = vmul.f32 %v2612, 1.442695
    %v2638 = vpow.pop %v2637
    %v2639 = vmul.f32 %v2613, 1.442695
    %v2640 = vpow.pop %v2639
    %v2641 = vmul.f32 %v2614, 1.442695
    %v2642 = vpow.pop %v2641
    %v2643 = vmul.f32 %v2615, 1.442695
    %v2644 = vpow.pop %v2643
    %v2645 = vmul.f32 %v2616, 1.442695
    %v2646 = vpow.pop %v2645
    %v2647 = vmul.f32 %v2617, 1.442695
    %v2648 = vpow.pop %v2647
    %v2649 = vmul.f32 %v2618, 1.442695
    %v2650 = vpow.pop %v2649
    %v2651 = vadd.f32 %v2620, 1.0
    %v2652 = vadd.f32 %v2622, 1.0
    %v2653 = vadd.f32 %v2624, 1.0
    %v2654 = vadd.f32 %v2626, 1.0
    %v2655 = vadd.f32 %v2628, 1.0
    %v2656 = vadd.f32 %v2630, 1.0
    %v2657 = vadd.f32 %v2632, 1.0
    %v2658 = vadd.f32 %v2634, 1.0
    %v2659 = vadd.f32 %v2636, 1.0
    %v2660 = vadd.f32 %v2638, 1.0
    %v2661 = vadd.f32 %v2640, 1.0
    %v2662 = vadd.f32 %v2642, 1.0
    %v2663 = vadd.f32 %v2644, 1.0
    %v2664 = vadd.f32 %v2646, 1.0
    %v2665 = vadd.f32 %v2648, 1.0
    %v2666 = vadd.f32 %v2650, 1.0
    %v2667 = vrcp.pop %v2651
    %v2668 = vrcp.pop %v2652
    %v2669 = vrcp.pop %v2653
    %v2670 = vrcp.pop %v2654
    %v2671 = vrcp.pop %v2655
    %v2672 = vrcp.pop %v2656
    %v2673 = vrcp.pop %v2657
    %v2674 = vrcp.pop %v2658
    %v2675 = vrcp.pop %v2659
    %v2676 = vrcp.pop %v2660
    %v2677 = vrcp.pop %v2661
    %v2678 = vrcp.pop %v2662
    %v2679 = vrcp.pop %v2663
    %v2680 = vrcp.pop %v2664
    %v2681 = vrcp.pop %v2665
    %v2682 = vrcp.pop %v2666
    %2683 = vst [vmem:[%s13] sm:$0xff] %v2667
    %2684 = vst [vmem:[%s13 + $0x8] sm:$0xff] %v2668
    %2685 = vst [vmem:[%s13 + $0x10] sm:$0xff] %v2669
    %2686 = vst [vmem:[%s13 + $0x18] sm:$0xff] %v2670
    %2687 = vst [vmem:[%s13 + $0x20] sm:$0xff] %v2671
    %2688 = vst [vmem:[%s13 + $0x28] sm:$0xff] %v2672
    %2689 = vst [vmem:[%s13 + $0x30] sm:$0xff] %v2673
    %2690 = vst [vmem:[%s13 + $0x38] sm:$0xff] %v2674
    %2691 = vst [vmem:[%s13 + $0x40] sm:$0xff] %v2675
    %2692 = vst [vmem:[%s13 + $0x48] sm:$0xff] %v2676
    %2693 = vst [vmem:[%s13 + $0x50] sm:$0xff] %v2677
    %2694 = vst [vmem:[%s13 + $0x58] sm:$0xff] %v2678
    %2695 = vst [vmem:[%s13 + $0x60] sm:$0xff] %v2679
    %2696 = vst [vmem:[%s13 + $0x68] sm:$0xff] %v2680
    %2697 = vst [vmem:[%s13 + $0x70] sm:$0xff] %v2681
    %2698 = vst [vmem:[%s13 + $0x78] sm:$0xff] %v2682
    // Predicated region
    $region62: #{autoencoder_forward.1} parent=1 // pred_check
      _
    $region63: #{autoencoder_forward.1} parent=1 // pred_check_branch
      %2700 = sbr.rel (0) target = $region65
    $region64: #{autoencoder_forward.1} parent=1 // pred_region
      _
    $region65: #{autoencoder_forward.1} parent=1 // pred_fallthru
      _
    // Predicated region
    $region66: #{autoencoder_forward.1} parent=1 // pred_check
      _
    $region67: #{autoencoder_forward.1} parent=1 // pred_check_branch
      %2702 = sbr.rel (0) target = $region69
    $region68: #{autoencoder_forward.1} parent=1 // pred_region
      _
    $region69: #{autoencoder_forward.1} parent=1 // pred_fallthru
      _
    %2703 = vsyncpa [#allocation3], 1
    %2704 = vsyncpa [#allocation5], 1

</llo_original>
